<compile_context>
chip_gen: v6e
topology: v6e:2x2x1
jax: 0.10.0
libtpu: 0.0.40
codegen_flags: <defaults>
</compile_context>

<pallas_src>
import functools
import math

import jax
import jax.numpy as jnp
from jax.experimental import pallas as pl
from jax.experimental.pallas import tpu as pltpu


def _round_up(x, m):
    return (x + m - 1) // m * m


def _cross_attn_kernel(tq, c9, dv, use_ones_col,
                       patches_ref, x_ref, w_ck_ref, w_qv_ref,
                       out_ref, k_scr, q_scr, v_scr):
    # patches: (1, N, C*9+1)  exp(x2) im2col patches, last lane = exp(x3)/e
    # x      : (1, N, D)
    # w_ck   : (C*9+1, Dk_pad) = [wconv @ wk ; 0-row]  (conv folded into K)
    # w_qv   : (D, Dk_pad+Dv_pad) = [wq / sqrt(dim_k) | wv]
    # out    : (1, tq, Dv_pad)
    qi = pl.program_id(1)
    cd = k_scr.dtype
    dk_pad = q_scr.shape[1]

    # ---- per-batch prologue: build K / Q / V caches once, reuse per q tile ----
    @pl.when(qi == 0)
    def _():
        pat = patches_ref[0]                                    # (N, C9+1)
        # K = exp(x2)_patches @ (wconv @ wk).  The img_dis column hits a zero
        # row of w_ck; the conv bias is dropped (softmax shift invariance).
        k = jnp.dot(pat, w_ck_ref[...], preferred_element_type=jnp.float32)
        k_scr[...] = k.astype(cd)
        # Fused Q|V projection: one MXU pass over x (wq pre-scaled by norm).
        qv = jnp.dot(x_ref[0], w_qv_ref[...],
                     preferred_element_type=jnp.float32)
        q_scr[...] = qv[:, :dk_pad].astype(cd)
        # img_dis = exp(x3)/e rides along as the last patches lane (lane-dense;
        # no separate (N,1) input and no in-kernel transpose needed).
        img_dis = pat[:, c9:c9 + 1].astype(jnp.float32)         # (N, 1)
        v = img_dis * qv[:, dk_pad:]                            # (N, Dv_pad) f32
        if use_ones_col:
            # Spare padded lane `dv` holds ones so the PV matmul also produces
            # the softmax row-sums with f32 MXU accumulation (no XLU reduce).
            lane = jax.lax.broadcasted_iota(jnp.int32, v.shape, 1)
            v = jnp.where(lane == dv, 1.0, v)
        v_scr[...] = v.astype(cd)

    # ---- per-query-tile attention: scores are only (tq, N) ----
    row0 = pl.multiple_of(qi * tq, tq)
    q_tile = q_scr[pl.ds(row0, tq), :]                          # (tq, Dk_pad)
    # q @ K^T as an NT matmul (flash-attention dimension_numbers): no
    # materialized transpose, f32 accumulation.
    s = jax.lax.dot_general(q_tile, k_scr[...],
                            dimension_numbers=(((1,), (1,)), ((), ())),
                            preferred_element_type=jnp.float32)  # (tq, N)
    m = jnp.max(s, axis=-1, keepdims=True)                      # f32 stats
    # exp in compute dtype: bf16 exp is the fast EUP path on v6e/v7x and feeds
    # the PV matmul without a cast (use compute_dtype=f32 on v5e).
    p = jnp.exp((s - m).astype(cd))                             # (tq, N)
    att = jnp.dot(p, v_scr[...],
                  preferred_element_type=jnp.float32)           # (tq, Dv_pad)
    if use_ones_col:
        l = att[:, dv:dv + 1]                                   # rowsum(p), f32
    else:
        l = jnp.sum(p.astype(jnp.float32), axis=-1, keepdims=True)
    att = att * pl.reciprocal(l, approx=True)
    out_ref[0] = att.astype(out_ref.dtype)


def _im2col_3x3_exp(x2):
    """(B, C, H, W) -> (B, H*W, C*9) patches of exp(x2), zero-padded halo."""
    B, C, H, W = x2.shape
    e = jnp.exp(x2)                                     # exp BEFORE duplication
    ep = jnp.pad(e, ((0, 0), (0, 0), (1, 1), (1, 1)))   # zero pad == conv SAME
    taps = []
    for di in range(3):
        for dj in range(3):
            taps.append(ep[:, :, di:di + H, dj:dj + W])  # (B, C, H, W)
    pat = jnp.stack(taps, axis=2)                        # (B, C, 9, H, W)
    return pat.reshape(B, C * 9, H * W).transpose(0, 2, 1)   # (B, N, C*9)


def our_cross_attention(x, x2, x3, params, *, tq=256,
                        compute_dtype=jnp.bfloat16):
    """x: (B, N, D), x2: (B, C, H, W), x3: (B, 1, H, W). Returns (B, N, Dv).

    params: wconv (C*9, Dv) flattened conv weight, bconv (1, Dv) conv bias
            (unused in the kernel: softmax is invariant to the per-query score
            shift it produces), wk (Dv, Dq), wv (D, Dv), wq (D, Dq).
    """
    wconv, wk, wv, wq = params["wconv"], params["wk"], params["wv"], params["wq"]
    B, N, D = x.shape
    C9 = wconv.shape[0]
    Dk = wk.shape[1]
    Dv = wv.shape[1]
    norm = 1.0 / math.sqrt(Dk)

    dk_pad = _round_up(Dk, 128)
    dv_pad = _round_up(Dv, 128)
    use_ones_col = Dv < dv_pad              # spare padded lane available
    C9p = C9 + 1                            # + img_dis lane

    # Offline weight folding / fusion (mathematically identical to the module).
    w_ck = jnp.pad(wconv @ wk, ((0, 1), (0, dk_pad - Dk)))       # (C9+1, Dk_pad)
    wq_s = jnp.pad(wq * norm, ((0, 0), (0, dk_pad - Dk)))        # (D, Dk_pad)
    wv_p = jnp.pad(wv, ((0, 0), (0, dv_pad - Dv)))               # (D, Dv_pad)
    w_qv = jnp.concatenate([wq_s, wv_p], axis=1)                 # (D, Dk+Dv pad)

    patches = _im2col_3x3_exp(x2)                                # (B, N, C*9)
    img_dis = jnp.exp(x3.reshape(B, 1, N).transpose(0, 2, 1) - 1.0)  # (B, N, 1)
    patches = jnp.concatenate([patches, img_dis], axis=-1)       # (B, N, C*9+1)

    cd = compute_dtype
    patches = patches.astype(cd)
    x_in = x.astype(cd)
    w_ck = w_ck.astype(cd)
    w_qv = w_qv.astype(cd)

    # Query tile: largest multiple-of-8 divisor of N not above the request
    # (falls back to a single full-N tile) -> no N padding / key masking ever.
    tq = min(tq, N)
    if N % tq or tq % 8:
        cands = [d for d in range(8, tq + 1, 8) if N % d == 0]
        tq = max(cands) if cands else N
    num_q = N // tq

    # Generation-aware VMEM budget: working-set estimate, capped at ~75% of the
    # detected per-core VMEM (~48 MiB on v7x, ~96 MiB on v5e/v6e).
    cdb = jnp.dtype(cd).itemsize
    outb = jnp.dtype(x.dtype).itemsize
    est = (
        N * (2 * dk_pad + dv_pad) * cdb                                  # caches
        + 2 * N * (_round_up(C9p, 128) + _round_up(D, 128)) * cdb        # inputs
        + 2 * (_round_up(C9p, 8) * dk_pad
               + _round_up(D, 8) * (dk_pad + dv_pad)) * cdb              # weights
        + 2 * tq * dv_pad * outb                                         # outputs
        + tq * N * (4 + cdb) + 4 * tq * (dk_pad + dv_pad)                # s/p tmp
    )
    try:
        vmem_cap = pltpu.get_tpu_info().vmem_capacity_bytes
    except Exception:
        vmem_cap = 64 << 20                 # conservative fallback (v7x VMEM)
    vmem_limit = int(min(max(2 * est, 32 << 20), (3 * vmem_cap) // 4))

    kernel = functools.partial(_cross_attn_kernel, tq, C9, Dv, use_ones_col)

    def _in_specs(resident_buffers):
        # All inputs are batch-resident (index maps ignore qi); single-buffer
        # them when supported to reclaim VMEM (matters on 64-MiB v7x).
        kw = ({} if resident_buffers >= 2
              else {"pipeline_mode": pl.Buffered(resident_buffers)})
        return [
            pl.BlockSpec((1, N, C9p), lambda b, qi: (b, 0, 0), **kw),
            pl.BlockSpec((1, N, D), lambda b, qi: (b, 0, 0), **kw),
            pl.BlockSpec((C9p, dk_pad), lambda b, qi: (0, 0), **kw),
            pl.BlockSpec((D, dk_pad + dv_pad), lambda b, qi: (0, 0), **kw),
        ]

    def _call(resident_buffers):
        return pl.pallas_call(
            kernel,
            out_shape=jax.ShapeDtypeStruct((B, N, dv_pad), x.dtype),
            grid_spec=pltpu.PrefetchScalarGridSpec(
                num_scalar_prefetch=0,
                grid=(B, num_q),
                in_specs=_in_specs(resident_buffers),
                out_specs=pl.BlockSpec((1, tq, dv_pad), lambda b, qi: (b, qi, 0)),
                scratch_shapes=[
                    pltpu.VMEM((N, dk_pad), cd),   # K cache
                    pltpu.VMEM((N, dk_pad), cd),   # Q cache (pre-scaled)
                    pltpu.VMEM((N, dv_pad), cd),   # V cache (img_dis + ones col)
                ],
            ),
            compiler_params=pltpu.CompilerParams(
                # batch must stay "parallel" (outer) and qi "arbitrary":
                # the qi==0 prologue fills per-core scratch caches.
                dimension_semantics=("parallel", "arbitrary"),
                vmem_limit_bytes=vmem_limit,
            ),
        )(patches, x_in, w_ck, w_qv)

    try:
        out = _call(1)
    except Exception:
        # This JAX build rejected pipeline_mode=Buffered(1); use default 2-deep.
        out = _call(2)

    # Padded lanes beyond Dv are not all zero (ones-column holds l/l == 1), so
    # slice back to the module's (B, N, Dv) contract.
    return out[:, :, :Dv]


def _reference(x, x2, x3, params):
    """Pure-JAX reference matching the PyTorch forward."""
    B, N, D = x.shape
    img_seg = jnp.exp(x2)
    img_dis = jnp.exp(x3.reshape(B, 1, -1).transpose(0, 2, 1)) / math.e
    x_hat = img_dis * x
    C9, Dv = params["wconv"].shape
    C = C9 // 9
    w_nchw = params["wconv"].T.reshape(Dv, C, 3, 3)
    conv = jax.lax.conv_general_dilated(
        img_seg, w_nchw, window_strides=(1, 1), padding="SAME",
        dimension_numbers=("NCHW", "OIHW", "NCHW"))
    conv = conv + params["bconv"].reshape(1, Dv, 1, 1)
    seg_f = conv.reshape(B, Dv, -1).transpose(0, 2, 1)
    k = seg_f @ params["wk"]
    v = x_hat @ params["wv"]
    q = x @ params["wq"]
    dist = jnp.einsum("bnd,bmd->bnm", q, k) / math.sqrt(params["wk"].shape[1])
    dist = jax.nn.softmax(dist, axis=-1)
    return jnp.einsum("bnm,bmd->bnd", dist, v)


if __name__ == "__main__":
    # Small shapes consistent with the module (dim_input == dim_v required,
    # dim_q == dim_k by construction).
    B, C, H, W = 2, 3, 8, 8
    N = H * W
    dim_input = 32
    dim_q = 64
    dim_v = 32

    key = jax.random.PRNGKey(0)
    k_x, k_x2, k_x3, k_wc, k_bc, k_wk, k_wv, k_wq = jax.random.split(key, 8)

    x = jax.random.normal(k_x, (B, N, dim_input), jnp.float32)
    x2 = jax.random.normal(k_x2, (B, C, H, W), jnp.float32) * 0.5
    x3 = jax.random.normal(k_x3, (B, 1, H, W), jnp.float32) * 0.5

    params = {
        # conv weight stored flattened (C*9, Dv); bias (1, Dv)
        "wconv": jax.random.normal(k_wc, (C * 9, dim_v), jnp.float32) * 0.1,
        "bconv": jax.random.normal(k_bc, (1, dim_v), jnp.float32) * 0.1,
        "wk": jax.random.normal(k_wk, (dim_v, dim_q), jnp.float32) * 0.1,
        "wv": jax.random.normal(k_wv, (dim_input, dim_v), jnp.float32) * 0.1,
        "wq": jax.random.normal(k_wq, (dim_input, dim_q), jnp.float32) * 0.1,
    }

    ref = jax.block_until_ready(_reference(x, x2, x3, params))

    # Default bf16 MXU-operand path (f32 softmax stats / accumulation).
    # tq=32 -> two query tiles per batch, exercises the prologue/cache reuse.
    out = jax.block_until_ready(our_cross_attention(x, x2, x3, params, tq=32))
    assert out.shape == (B, N, dim_v)
    assert jnp.allclose(out, ref, atol=5e-2, rtol=5e-2), \
        float(jnp.max(jnp.abs(out - ref)))

    # f32 compute path (tolerance loosened only for the approx reciprocal).
    out_f32 = jax.block_until_ready(
        our_cross_attention(x, x2, x3, params, tq=32,
                            compute_dtype=jnp.float32))
    assert jnp.allclose(out_f32, ref, atol=5e-3, rtol=5e-3), \
        float(jnp.max(jnp.abs(out_f32 - ref)))

    print("KERNEL_OK")
</pallas_src>

<mosaic_0001>
module attributes {stable_mosaic.version = 11 : i64} {
  func.func @_cross_attn_kernel(%arg0: i32, %arg1: i32, %arg2: memref<1x64x28xbf16, #tpu.memory_space<vmem>>, %arg3: memref<1x64x32xbf16, #tpu.memory_space<vmem>>, %arg4: memref<28x128xbf16, #tpu.memory_space<vmem>>, %arg5: memref<32x256xbf16, #tpu.memory_space<vmem>>, %arg6: memref<1x32x128xf32, #tpu.memory_space<vmem>>, %arg7: memref<64x128xbf16, #tpu.memory_space<vmem>>, %arg8: memref<64x128xbf16, #tpu.memory_space<vmem>>, %arg9: memref<64x128xbf16, #tpu.memory_space<vmem>>) attributes {dimension_semantics = [#tpu.dimension_semantics<parallel>, #tpu.dimension_semantics<arbitrary>], iteration_bounds = array<i64: 2, 2>, scalar_prefetch = 0 : i64, scratch_operands = 3 : i64, tpu.core_type = #tpu.core_type<tc>, window_params = [{pipeline_mode = #tpu.pipeline_mode<synchronous>, transform_indices = @transform_0, window_bounds = array<i64: 1, 64, 28>}, {pipeline_mode = #tpu.pipeline_mode<synchronous>, transform_indices = @transform_1, window_bounds = array<i64: 1, 64, 32>}, {pipeline_mode = #tpu.pipeline_mode<synchronous>, transform_indices = @transform_2, window_bounds = array<i64: 28, 128>}, {pipeline_mode = #tpu.pipeline_mode<synchronous>, transform_indices = @transform_3, window_bounds = array<i64: 32, 256>}, {transform_indices = @transform_4, window_bounds = array<i64: 1, 32, 128>}]} {
    %c0_i32 = arith.constant 0 : i32
    %0 = arith.cmpi eq, %arg1, %c0_i32 : i32
    %1 = arith.extui %0 : i1 to i32
    %c0_i32_0 = arith.constant 0 : i32
    %2 = arith.cmpi ne, %1, %c0_i32_0 : i32
    scf.if %2 {
      %c0_10 = arith.constant 0 : index
      %c0_11 = arith.constant 0 : index
      %c0_12 = arith.constant 0 : index
      %24 = vector.load %arg2[%c0_10, %c0_11, %c0_12] : memref<1x64x28xbf16, #tpu.memory_space<vmem>>, vector<1x64x28xbf16>
      %25 = vector.shape_cast %24 : vector<1x64x28xbf16> to vector<64x28xbf16>
      %c0_13 = arith.constant 0 : index
      %c0_14 = arith.constant 0 : index
      %26 = vector.load %arg4[%c0_13, %c0_14] : memref<28x128xbf16, #tpu.memory_space<vmem>>, vector<28x128xbf16>
      %cst_15 = arith.constant dense<0.000000e+00> : vector<64x128xf32>
      %27 = tpu.matmul %25, %26, %cst_15 {dimension_numbers = #tpu.dot_dimension_numbers<[1], [0], [0], [1], [0, 0, 1, 1], [], []>} : vector<64x28xbf16>, vector<28x128xbf16>, vector<64x128xf32> -> vector<64x128xf32>
      %28 = arith.truncf %27 : vector<64x128xf32> to vector<64x128xbf16>
      %c0_16 = arith.constant 0 : index
      %c0_17 = arith.constant 0 : index
      %29 = vector.load %arg7[%c0_16, %c0_17] : memref<64x128xbf16, #tpu.memory_space<vmem>>, vector<64x128xbf16>
      tpu.vector_store %arg7[%c0_16, %c0_17], %28 {strides = array<i32>} : memref<64x128xbf16, #tpu.memory_space<vmem>>, vector<64x128xbf16>,
      %c0_18 = arith.constant 0 : index
      %c0_19 = arith.constant 0 : index
      %c0_20 = arith.constant 0 : index
      %30 = vector.load %arg3[%c0_18, %c0_19, %c0_20] : memref<1x64x32xbf16, #tpu.memory_space<vmem>>, vector<1x64x32xbf16>
      %31 = vector.shape_cast %30 : vector<1x64x32xbf16> to vector<64x32xbf16>
      %c0_21 = arith.constant 0 : index
      %c0_22 = arith.constant 0 : index
      %32 = vector.load %arg5[%c0_21, %c0_22] : memref<32x256xbf16, #tpu.memory_space<vmem>>, vector<32x256xbf16>
      %cst_23 = arith.constant dense<0.000000e+00> : vector<64x256xf32>
      %33 = tpu.matmul %31, %32, %cst_23 {dimension_numbers = #tpu.dot_dimension_numbers<[1], [0], [0], [1], [0, 0, 1, 1], [], []>} : vector<64x32xbf16>, vector<32x256xbf16>, vector<64x256xf32> -> vector<64x256xf32>
      %34 = vector.extract_strided_slice %33 {offsets = [0, 0], sizes = [64, 128], strides = [1, 1]} : vector<64x256xf32> to vector<64x128xf32>
      %35 = arith.truncf %34 : vector<64x128xf32> to vector<64x128xbf16>
      %c0_24 = arith.constant 0 : index
      %c0_25 = arith.constant 0 : index
      %36 = vector.load %arg8[%c0_24, %c0_25] : memref<64x128xbf16, #tpu.memory_space<vmem>>, vector<64x128xbf16>
      tpu.vector_store %arg8[%c0_24, %c0_25], %35 {strides = array<i32>} : memref<64x128xbf16, #tpu.memory_space<vmem>>, vector<64x128xbf16>,
      %37 = vector.extract_strided_slice %25 {offsets = [0, 27], sizes = [64, 1], strides = [1, 1]} : vector<64x28xbf16> to vector<64x1xbf16>
      %38 = arith.extf %37 : vector<64x1xbf16> to vector<64x1xf32>
      %39 = vector.extract_strided_slice %33 {offsets = [0, 128], sizes = [64, 128], strides = [1, 1]} : vector<64x256xf32> to vector<64x128xf32>
      %40 = vector.broadcast %38 : vector<64x1xf32> to vector<64x128xf32>
      %41 = arith.mulf %40, %39 : vector<64x128xf32>
      %42 = tpu.iota {dimensions = array<i32: 1>} : vector<64x128xi32>
      %c32_i32_26 = arith.constant 32 : i32
      %43 = vector.broadcast %c32_i32_26 : i32 to vector<64x128xi32>
      %44 = arith.cmpi eq, %42, %43 : vector<64x128xi32>
      %cst_27 = arith.constant 1.000000e+00 : f32
      %45 = vector.broadcast %cst_27 : f32 to vector<64x128xf32>
      %46 = arith.select %44, %45, %41 : vector<64x128xi1>, vector<64x128xf32>
      %47 = arith.truncf %46 : vector<64x128xf32> to vector<64x128xbf16>
      %c0_28 = arith.constant 0 : index
      %c0_29 = arith.constant 0 : index
      %48 = vector.load %arg9[%c0_28, %c0_29] : memref<64x128xbf16, #tpu.memory_space<vmem>>, vector<64x128xbf16>
      tpu.vector_store %arg9[%c0_28, %c0_29], %47 {strides = array<i32>} : memref<64x128xbf16, #tpu.memory_space<vmem>>, vector<64x128xbf16>,
    } else {
    }
    %c32_i32 = arith.constant 32 : i32
    %3 = arith.muli %arg1, %c32_i32 : i32
    %4 = tpu.assume_multiple %3, 32 : i32
    %5 = arith.index_cast %4 : i32 to index
    %c0 = arith.constant 0 : index
    %6 = vector.load %arg8[%5, %c0] : memref<64x128xbf16, #tpu.memory_space<vmem>>, vector<32x128xbf16>
    %c0_1 = arith.constant 0 : index
    %c0_2 = arith.constant 0 : index
    %7 = vector.load %arg7[%c0_1, %c0_2] : memref<64x128xbf16, #tpu.memory_space<vmem>>, vector<64x128xbf16>
    %cst = arith.constant dense<0.000000e+00> : vector<32x64xf32>
    %8 = tpu.matmul %6, %7, %cst {dimension_numbers = #tpu.dot_dimension_numbers<[1], [1], [0], [0], [0, 0, 1, 0], [], []>} : vector<32x128xbf16>, vector<64x128xbf16>, vector<32x64xf32> -> vector<32x64xf32>
    %cst_3 = arith.constant dense<0xFF800000> : vector<32xf32>
    %9 = vector.multi_reduction <maximumf>, %8, %cst_3 [1] : vector<32x64xf32> to vector<32xf32>
    %10 = vector.shape_cast %9 : vector<32xf32> to vector<32x1xf32>
    %11 = vector.broadcast %10 : vector<32x1xf32> to vector<32x64xf32>
    %12 = arith.subf %8, %11 : vector<32x64xf32>
    %13 = arith.truncf %12 : vector<32x64xf32> to vector<32x64xbf16>
    %14 = math.exp %13 : vector<32x64xbf16>
    %c0_4 = arith.constant 0 : index
    %c0_5 = arith.constant 0 : index
    %15 = vector.load %arg9[%c0_4, %c0_5] : memref<64x128xbf16, #tpu.memory_space<vmem>>, vector<64x128xbf16>
    %cst_6 = arith.constant dense<0.000000e+00> : vector<32x128xf32>
    %16 = tpu.matmul %14, %15, %cst_6 {dimension_numbers = #tpu.dot_dimension_numbers<[1], [0], [0], [1], [0, 0, 1, 1], [], []>} : vector<32x64xbf16>, vector<64x128xbf16>, vector<32x128xf32> -> vector<32x128xf32>
    %17 = vector.extract_strided_slice %16 {offsets = [0, 32], sizes = [32, 1], strides = [1, 1]} : vector<32x128xf32> to vector<32x1xf32>
    %18 = tpu.reciprocal %17 {approx = true} : vector<32x1xf32> -> vector<32x1xf32>
    %19 = vector.broadcast %18 : vector<32x1xf32> to vector<32x128xf32>
    %20 = arith.mulf %16, %19 : vector<32x128xf32>
    %c0_7 = arith.constant 0 : index
    %c0_8 = arith.constant 0 : index
    %c0_9 = arith.constant 0 : index
    %21 = vector.load %arg6[%c0_7, %c0_8, %c0_9] : memref<1x32x128xf32, #tpu.memory_space<vmem>>, vector<1x32x128xf32>
    %22 = vector.shape_cast %21 : vector<1x32x128xf32> to vector<32x128xf32>
    %23 = vector.shape_cast %20 : vector<32x128xf32> to vector<1x32x128xf32>
    tpu.vector_store %arg6[%c0_7, %c0_8, %c0_9], %23 {strides = array<i32>} : memref<1x32x128xf32, #tpu.memory_space<vmem>>, vector<1x32x128xf32>,
    return
  }
  func.func @transform_0(%arg0: i32, %arg1: i32) -> (i32, i32, i32) {
    %c0_i32 = arith.constant 0 : i32
    %c0_i32_0 = arith.constant 0 : i32
    %c0_i32_1 = arith.constant 0 : i32
    return %arg0, %c0_i32, %c0_i32_0 : i32, i32, i32
  }
  func.func @transform_1(%arg0: i32, %arg1: i32) -> (i32, i32, i32) {
    %c0_i32 = arith.constant 0 : i32
    %c0_i32_0 = arith.constant 0 : i32
    %c0_i32_1 = arith.constant 0 : i32
    return %arg0, %c0_i32, %c0_i32_0 : i32, i32, i32
  }
  func.func @transform_2(%arg0: i32, %arg1: i32) -> (i32, i32) {
    %c0_i32 = arith.constant 0 : i32
    %c0_i32_0 = arith.constant 0 : i32
    %c0_i32_1 = arith.constant 0 : i32
    return %c0_i32, %c0_i32_0 : i32, i32
  }
  func.func @transform_3(%arg0: i32, %arg1: i32) -> (i32, i32) {
    %c0_i32 = arith.constant 0 : i32
    %c0_i32_0 = arith.constant 0 : i32
    %c0_i32_1 = arith.constant 0 : i32
    return %c0_i32, %c0_i32_0 : i32, i32
  }
  func.func @transform_4(%arg0: i32, %arg1: i32) -> (i32, i32, i32) {
    %c0_i32 = arith.constant 0 : i32
    %c0_i32_0 = arith.constant 0 : i32
    return %arg0, %arg1, %c0_i32 : i32, i32, i32
  }
}

module attributes {stable_mosaic.version = 11 : i64} {
  func.func @_cross_attn_kernel(%arg0: i32, %arg1: i32, %arg2: memref<1x64x28xbf16, #tpu.memory_space<vmem>>, %arg3: memref<1x64x32xbf16, #tpu.memory_space<vmem>>, %arg4: memref<28x128xbf16, #tpu.memory_space<vmem>>, %arg5: memref<32x256xbf16, #tpu.memory_space<vmem>>, %arg6: memref<1x32x128xf32, #tpu.memory_space<vmem>>, %arg7: memref<64x128xbf16, #tpu.memory_space<vmem>>, %arg8: memref<64x128xbf16, #tpu.memory_space<vmem>>, %arg9: memref<64x128xbf16, #tpu.memory_space<vmem>>) attributes {dimension_semantics = [#tpu.dimension_semantics<parallel>, #tpu.dimension_semantics<arbitrary>], iteration_bounds = array<i64: 2, 2>, scalar_prefetch = 0 : i64, scratch_operands = 3 : i64, tpu.core_type = #tpu.core_type<tc>, window_params = [{transform_indices = @transform_0, window_bounds = array<i64: 1, 64, 28>}, {transform_indices = @transform_1, window_bounds = array<i64: 1, 64, 32>}, {pipeline_mode = #tpu.pipeline_mode<synchronous>, transform_indices = @transform_2, window_bounds = array<i64: 28, 128>}, {pipeline_mode = #tpu.pipeline_mode<synchronous>, transform_indices = @transform_3, window_bounds = array<i64: 32, 256>}, {transform_indices = @transform_4, window_bounds = array<i64: 1, 32, 128>}]} {
    %c0_i32 = arith.constant 0 : i32
    %0 = arith.cmpi eq, %arg1, %c0_i32 : i32
    %1 = arith.extui %0 : i1 to i32
    %c0_i32_0 = arith.constant 0 : i32
    %2 = arith.cmpi ne, %1, %c0_i32_0 : i32
    scf.if %2 {
      %c0_10 = arith.constant 0 : index
      %c0_11 = arith.constant 0 : index
      %c0_12 = arith.constant 0 : index
      %24 = vector.load %arg2[%c0_10, %c0_11, %c0_12] : memref<1x64x28xbf16, #tpu.memory_space<vmem>>, vector<1x64x28xbf16>
      %25 = vector.shape_cast %24 : vector<1x64x28xbf16> to vector<64x28xbf16>
      %c0_13 = arith.constant 0 : index
      %c0_14 = arith.constant 0 : index
      %26 = vector.load %arg4[%c0_13, %c0_14] : memref<28x128xbf16, #tpu.memory_space<vmem>>, vector<28x128xbf16>
      %cst_15 = arith.constant dense<0.000000e+00> : vector<64x128xf32>
      %27 = tpu.matmul %25, %26, %cst_15 {dimension_numbers = #tpu.dot_dimension_numbers<[1], [0], [0], [1], [0, 0, 1, 1], [], []>} : vector<64x28xbf16>, vector<28x128xbf16>, vector<64x128xf32> -> vector<64x128xf32>
      %28 = arith.truncf %27 : vector<64x128xf32> to vector<64x128xbf16>
      %c0_16 = arith.constant 0 : index
      %c0_17 = arith.constant 0 : index
      %29 = vector.load %arg7[%c0_16, %c0_17] : memref<64x128xbf16, #tpu.memory_space<vmem>>, vector<64x128xbf16>
      tpu.vector_store %arg7[%c0_16, %c0_17], %28 {strides = array<i32>} : memref<64x128xbf16, #tpu.memory_space<vmem>>, vector<64x128xbf16>,
      %c0_18 = arith.constant 0 : index
      %c0_19 = arith.constant 0 : index
      %c0_20 = arith.constant 0 : index
      %30 = vector.load %arg3[%c0_18, %c0_19, %c0_20] : memref<1x64x32xbf16, #tpu.memory_space<vmem>>, vector<1x64x32xbf16>
      %31 = vector.shape_cast %30 : vector<1x64x32xbf16> to vector<64x32xbf16>
      %c0_21 = arith.constant 0 : index
      %c0_22 = arith.constant 0 : index
      %32 = vector.load %arg5[%c0_21, %c0_22] : memref<32x256xbf16, #tpu.memory_space<vmem>>, vector<32x256xbf16>
      %cst_23 = arith.constant dense<0.000000e+00> : vector<64x256xf32>
      %33 = tpu.matmul %31, %32, %cst_23 {dimension_numbers = #tpu.dot_dimension_numbers<[1], [0], [0], [1], [0, 0, 1, 1], [], []>} : vector<64x32xbf16>, vector<32x256xbf16>, vector<64x256xf32> -> vector<64x256xf32>
      %34 = vector.extract_strided_slice %33 {offsets = [0, 0], sizes = [64, 128], strides = [1, 1]} : vector<64x256xf32> to vector<64x128xf32>
      %35 = arith.truncf %34 : vector<64x128xf32> to vector<64x128xbf16>
      %c0_24 = arith.constant 0 : index
      %c0_25 = arith.constant 0 : index
      %36 = vector.load %arg8[%c0_24, %c0_25] : memref<64x128xbf16, #tpu.memory_space<vmem>>, vector<64x128xbf16>
      tpu.vector_store %arg8[%c0_24, %c0_25], %35 {strides = array<i32>} : memref<64x128xbf16, #tpu.memory_space<vmem>>, vector<64x128xbf16>,
      %37 = vector.extract_strided_slice %25 {offsets = [0, 27], sizes = [64, 1], strides = [1, 1]} : vector<64x28xbf16> to vector<64x1xbf16>
      %38 = arith.extf %37 : vector<64x1xbf16> to vector<64x1xf32>
      %39 = vector.extract_strided_slice %33 {offsets = [0, 128], sizes = [64, 128], strides = [1, 1]} : vector<64x256xf32> to vector<64x128xf32>
      %40 = vector.broadcast %38 : vector<64x1xf32> to vector<64x128xf32>
      %41 = arith.mulf %40, %39 : vector<64x128xf32>
      %42 = tpu.iota {dimensions = array<i32: 1>} : vector<64x128xi32>
      %c32_i32_26 = arith.constant 32 : i32
      %43 = vector.broadcast %c32_i32_26 : i32 to vector<64x128xi32>
      %44 = arith.cmpi eq, %42, %43 : vector<64x128xi32>
      %cst_27 = arith.constant 1.000000e+00 : f32
      %45 = vector.broadcast %cst_27 : f32 to vector<64x128xf32>
      %46 = arith.select %44, %45, %41 : vector<64x128xi1>, vector<64x128xf32>
      %47 = arith.truncf %46 : vector<64x128xf32> to vector<64x128xbf16>
      %c0_28 = arith.constant 0 : index
      %c0_29 = arith.constant 0 : index
      %48 = vector.load %arg9[%c0_28, %c0_29] : memref<64x128xbf16, #tpu.memory_space<vmem>>, vector<64x128xbf16>
      tpu.vector_store %arg9[%c0_28, %c0_29], %47 {strides = array<i32>} : memref<64x128xbf16, #tpu.memory_space<vmem>>, vector<64x128xbf16>,
    } else {
    }
    %c32_i32 = arith.constant 32 : i32
    %3 = arith.muli %arg1, %c32_i32 : i32
    %4 = tpu.assume_multiple %3, 32 : i32
    %5 = arith.index_cast %4 : i32 to index
    %c0 = arith.constant 0 : index
    %6 = vector.load %arg8[%5, %c0] : memref<64x128xbf16, #tpu.memory_space<vmem>>, vector<32x128xbf16>
    %c0_1 = arith.constant 0 : index
    %c0_2 = arith.constant 0 : index
    %7 = vector.load %arg7[%c0_1, %c0_2] : memref<64x128xbf16, #tpu.memory_space<vmem>>, vector<64x128xbf16>
    %cst = arith.constant dense<0.000000e+00> : vector<32x64xf32>
    %8 = tpu.matmul %6, %7, %cst {dimension_numbers = #tpu.dot_dimension_numbers<[1], [1], [0], [0], [0, 0, 1, 0], [], []>} : vector<32x128xbf16>, vector<64x128xbf16>, vector<32x64xf32> -> vector<32x64xf32>
    %cst_3 = arith.constant dense<0xFF800000> : vector<32xf32>
    %9 = vector.multi_reduction <maximumf>, %8, %cst_3 [1] : vector<32x64xf32> to vector<32xf32>
    %10 = vector.shape_cast %9 : vector<32xf32> to vector<32x1xf32>
    %11 = vector.broadcast %10 : vector<32x1xf32> to vector<32x64xf32>
    %12 = arith.subf %8, %11 : vector<32x64xf32>
    %13 = arith.truncf %12 : vector<32x64xf32> to vector<32x64xbf16>
    %14 = math.exp %13 : vector<32x64xbf16>
    %c0_4 = arith.constant 0 : index
    %c0_5 = arith.constant 0 : index
    %15 = vector.load %arg9[%c0_4, %c0_5] : memref<64x128xbf16, #tpu.memory_space<vmem>>, vector<64x128xbf16>
    %cst_6 = arith.constant dense<0.000000e+00> : vector<32x128xf32>
    %16 = tpu.matmul %14, %15, %cst_6 {dimension_numbers = #tpu.dot_dimension_numbers<[1], [0], [0], [1], [0, 0, 1, 1], [], []>} : vector<32x64xbf16>, vector<64x128xbf16>, vector<32x128xf32> -> vector<32x128xf32>
    %17 = vector.extract_strided_slice %16 {offsets = [0, 32], sizes = [32, 1], strides = [1, 1]} : vector<32x128xf32> to vector<32x1xf32>
    %18 = tpu.reciprocal %17 {approx = true} : vector<32x1xf32> -> vector<32x1xf32>
    %19 = vector.broadcast %18 : vector<32x1xf32> to vector<32x128xf32>
    %20 = arith.mulf %16, %19 : vector<32x128xf32>
    %c0_7 = arith.constant 0 : index
    %c0_8 = arith.constant 0 : index
    %c0_9 = arith.constant 0 : index
    %21 = vector.load %arg6[%c0_7, %c0_8, %c0_9] : memref<1x32x128xf32, #tpu.memory_space<vmem>>, vector<1x32x128xf32>
    %22 = vector.shape_cast %21 : vector<1x32x128xf32> to vector<32x128xf32>
    %23 = vector.shape_cast %20 : vector<32x128xf32> to vector<1x32x128xf32>
    tpu.vector_store %arg6[%c0_7, %c0_8, %c0_9], %23 {strides = array<i32>} : memref<1x32x128xf32, #tpu.memory_space<vmem>>, vector<1x32x128xf32>,
    return
  }
  func.func @transform_0(%arg0: i32, %arg1: i32) -> (i32, i32, i32) {
    %c0_i32 = arith.constant 0 : i32
    %c0_i32_0 = arith.constant 0 : i32
    %c0_i32_1 = arith.constant 0 : i32
    return %arg0, %c0_i32, %c0_i32_0 : i32, i32, i32
  }
  func.func @transform_1(%arg0: i32, %arg1: i32) -> (i32, i32, i32) {
    %c0_i32 = arith.constant 0 : i32
    %c0_i32_0 = arith.constant 0 : i32
    %c0_i32_1 = arith.constant 0 : i32
    return %arg0, %c0_i32, %c0_i32_0 : i32, i32, i32
  }
  func.func @transform_2(%arg0: i32, %arg1: i32) -> (i32, i32) {
    %c0_i32 = arith.constant 0 : i32
    %c0_i32_0 = arith.constant 0 : i32
    %c0_i32_1 = arith.constant 0 : i32
    return %c0_i32, %c0_i32_0 : i32, i32
  }
  func.func @transform_3(%arg0: i32, %arg1: i32) -> (i32, i32) {
    %c0_i32 = arith.constant 0 : i32
    %c0_i32_0 = arith.constant 0 : i32
    %c0_i32_1 = arith.constant 0 : i32
    return %c0_i32, %c0_i32_0 : i32, i32
  }
  func.func @transform_4(%arg0: i32, %arg1: i32) -> (i32, i32, i32) {
    %c0_i32 = arith.constant 0 : i32
    %c0_i32_0 = arith.constant 0 : i32
    return %arg0, %arg1, %c0_i32 : i32, i32, i32
  }
}

</mosaic_0001>

<llo_original>
// kernel: tpu_custom_call.1
$region0: #{tpu_custom_call.1}
  #allocation0 [shape = 'u32[]', space=smem, size = 0x4, offset = 0x4, fixed_abs, tag = 'smem constant byte address 0x4 - core index']
  #allocation1 [shape = 'u32[144,128]{1,0:T(1,128)}', space=vmem, size = 0x12000, scoped, tag = 'internal scratch']
  #allocation2 [shape = 'bf16[64,128]{1,0:T(8,128)(2,1)}', space=vmem, size = 0x4000, scoped, tag = 'scratch operand']
  #allocation3 [shape = 'bf16[64,128]{1,0:T(8,128)(2,1)}', space=vmem, size = 0x4000, scoped, tag = 'scratch operand']
  #allocation4 [shape = 'bf16[64,128]{1,0:T(8,128)(2,1)}', space=vmem, size = 0x4000, scoped, tag = 'scratch operand']
  %s0 = inlined_call_operand.vmem [shape: bf16[2,64,28], index: 0, kind: input, shape index: {}]
  %s1 = inlined_call_operand.vmem [shape: bf16[2,64,32], index: 1, kind: input, shape index: {}]
  %s2 = inlined_call_operand.vmem [shape: bf16[28,128], index: 2, kind: input, shape index: {}]
  %s3 = inlined_call_operand.vmem [shape: bf16[32,256], index: 3, kind: input, shape index: {}]
  %s4 = inlined_call_operand.hbm [shape: f32[2,64,128], index: 4, kind: output, shape index: {}]
  %s5 = sld [smem:[#allocation0]]
  $region53: #{tpu_custom_call.1} parent=0
    _
  %s7 = ssub.s32 1, %s5
  %s8 = scalar_select 0, %s7, %s5
  $region1: #{tpu_custom_call.1} parent=0
    #allocation5 [shape = 'u8[32768]{0}', space=vmem, size = 0x8000, scoped, tag = 'output window, operand 0']
    #allocation6 [shape = 's32[2]{0}', space=sflag, size = 0x8, scoped, tag = 'scoped memory for tpu_custom_call.1']
    %9 = vsyncpa [#allocation6], 0
    %s10 = scalar_lea.sflag [#allocation6], 1
    %11 = vsyncpa %s10, 0
    loop: start=0, step=1, limit=6
    $region2: #{tpu_custom_call.1} parent=1 // loop_pre_header
      _
    $region3: #{tpu_custom_call.1} parent=1 // loop_header
      %s13 = sphi 0, %s17
      %p14 = scmp.ge.s32.totalorder %s13, 6
      %s20 = sphi 0, %s32
      %s21 = sphi 0, %s28
      %s22 = sphi 0, %s20
      %s23 = sphi 0, %s21
      %s24 = sphi 0, %s22
      %s25 = sphi 0, %s23
      %s35 = sphi 0, %s37
      %s38 = sphi 0, %s35
      %s39 = sphi 0, %s38
      %s55 = sphi 0, %s39
      %s61 = sphi 0, %s63
      %s64 = sphi 0, %s61
      %s65 = sphi 0, %s64
      %s81 = sphi 0, %s65
      %s85 = sphi 0, %s85
      %s87 = sphi 0, %s85
      %s88 = sphi 0, %s87
      %s102 = sphi 0, %s88
      %s106 = sphi 0, %s106
      %s108 = sphi 0, %s106
      %s109 = sphi 0, %s108
      %s123 = sphi 0, %s109
      %s131 = sphi 0, %s133
      %s134 = sphi 0, %s131
      %s135 = sphi 0, %s134
      %s151 = sphi 0, %s135
    $region4: #{tpu_custom_call.1} parent=1 // loop_header_branch
      %16 = sbr.rel (%p14) target = $region8
    $region5: #{tpu_custom_call.1} parent=1 // loop_body
      %s18 = ssub.s32 %s13, 1
      %s19 = ssub.s32 %s13, 2
      %s26 = sadd.s32 1, %s21
      %p27 = scmp.ge.s32.totalorder %s26, 2
      %s28 = scalar_select %p27, 0, %s26
      %s29 = sadd.s32 1, %s20
      %s30 = scalar_select %p27, %s29, %s20
      %p31 = scmp.ge.s32.totalorder %s30, 2
      %s32 = scalar_select %p31, 0, %s30
      %s33 = ssub.s32 %s20, %s32
      %p34 = scmp.eq.s32.totalorder %s33, 0
      %s36 = sadd.s32 %s35, 1
      %s37 = scalar_select %p34, %s35, %s36
      %p40 = pneg %p34
      %p41 = scmp.eq.s32.totalorder %s13, 3
      %p42 = por %p40, %p41
      %p43 = scmp.ne.s32.totalorder %s35, %s38
      %p44 = scmp.eq.s32.totalorder %s13, 0
      %p45 = por %p43, %p44
      %p46 = scmp.ne.s32.totalorder %s35, %s38
      %p47 = scmp.eq.s32.totalorder %s18, 3
      %p48 = por %p46, %p47
      %p49 = scmp.ne.s32.totalorder %s38, %s39
      %p50 = scmp.eq.s32.totalorder %s18, 0
      %p51 = por %p49, %p50
      %p52 = scmp.ne.s32.totalorder %s38, %s39
      %p53 = scmp.eq.s32.totalorder %s19, 3
      %p54 = por %p52, %p53
      %p56 = scmp.ne.s32.totalorder %s39, %s55
      %p57 = scmp.eq.s32.totalorder %s19, 0
      %p58 = por %p56, %p57
      %s59 = ssub.s32 %s20, %s32
      %p60 = scmp.eq.s32.totalorder %s59, 0
      %s62 = sadd.s32 %s61, 1
      %s63 = scalar_select %p60, %s61, %s62
      %p66 = pneg %p60
      %p67 = scmp.eq.s32.totalorder %s13, 3
      %p68 = por %p66, %p67
      %p69 = scmp.ne.s32.totalorder %s61, %s64
      %p70 = scmp.eq.s32.totalorder %s13, 0
      %p71 = por %p69, %p70
      %p72 = scmp.ne.s32.totalorder %s61, %s64
      %p73 = scmp.eq.s32.totalorder %s18, 3
      %p74 = por %p72, %p73
      %p75 = scmp.ne.s32.totalorder %s64, %s65
      %p76 = scmp.eq.s32.totalorder %s18, 0
      %p77 = por %p75, %p76
      %p78 = scmp.ne.s32.totalorder %s64, %s65
      %p79 = scmp.eq.s32.totalorder %s19, 3
      %p80 = por %p78, %p79
      %p82 = scmp.ne.s32.totalorder %s65, %s81
      %p83 = scmp.eq.s32.totalorder %s19, 0
      %p84 = por %p82, %p83
      %s86 = sadd.s32 %s85, 1
      %p89 = scmp.eq.s32.totalorder %s13, 3
      %p90 = scmp.ne.s32.totalorder %s85, %s87
      %p91 = scmp.eq.s32.totalorder %s13, 0
      %p92 = por %p90, %p91
      %p93 = scmp.ne.s32.totalorder %s85, %s87
      %p94 = scmp.eq.s32.totalorder %s18, 3
      %p95 = por %p93, %p94
      %p96 = scmp.ne.s32.totalorder %s87, %s88
      %p97 = scmp.eq.s32.totalorder %s18, 0
      %p98 = por %p96, %p97
      %p99 = scmp.ne.s32.totalorder %s87, %s88
      %p100 = scmp.eq.s32.totalorder %s19, 3
      %p101 = por %p99, %p100
      %p103 = scmp.ne.s32.totalorder %s88, %s102
      %p104 = scmp.eq.s32.totalorder %s19, 0
      %p105 = por %p103, %p104
      %s107 = sadd.s32 %s106, 1
      %p110 = scmp.eq.s32.totalorder %s13, 3
      %p111 = scmp.ne.s32.totalorder %s106, %s108
      %p112 = scmp.eq.s32.totalorder %s13, 0
      %p113 = por %p111, %p112
      %p114 = scmp.ne.s32.totalorder %s106, %s108
      %p115 = scmp.eq.s32.totalorder %s18, 3
      %p116 = por %p114, %p115
      %p117 = scmp.ne.s32.totalorder %s108, %s109
      %p118 = scmp.eq.s32.totalorder %s18, 0
      %p119 = por %p117, %p118
      %p120 = scmp.ne.s32.totalorder %s108, %s109
      %p121 = scmp.eq.s32.totalorder %s19, 3
      %p122 = por %p120, %p121
      %p124 = scmp.ne.s32.totalorder %s109, %s123
      %p125 = scmp.eq.s32.totalorder %s19, 0
      %p126 = por %p124, %p125
      %s127 = ssub.s32 %s20, %s32
      %s128 = ssub.s32 %s21, %s28
      %s129 = sor.u32 %s127, %s128
      %p130 = scmp.eq.s32.totalorder %s129, 0
      %s132 = sadd.s32 %s131, 1
      %s133 = scalar_select %p130, %s131, %s132
      %p136 = pneg %p130
      %p137 = scmp.eq.s32.totalorder %s13, 3
      %p138 = por %p136, %p137
      %p139 = scmp.ne.s32.totalorder %s131, %s134
      %p140 = scmp.eq.s32.totalorder %s13, 0
      %p141 = por %p139, %p140
      %p142 = scmp.ne.s32.totalorder %s131, %s134
      %p143 = scmp.eq.s32.totalorder %s18, 3
      %p144 = por %p142, %p143
      %p145 = scmp.ne.s32.totalorder %s134, %s135
      %p146 = scmp.eq.s32.totalorder %s18, 0
      %p147 = por %p145, %p146
      %p148 = scmp.ne.s32.totalorder %s134, %s135
      %p149 = scmp.eq.s32.totalorder %s19, 3
      %p150 = por %p148, %p149
      %p152 = scmp.ne.s32.totalorder %s135, %s151
      %p153 = scmp.eq.s32.totalorder %s19, 0
      %p154 = por %p152, %p153
      %p155 = scmp.le.s32.totalorder 1, %s13
      %p156 = scmp.lt.s32.totalorder %s13, 5
      %p157 = pnand %p155, %p156
      %p158 = pneg %p157
      // Predicated region
      $region9: #{tpu_custom_call.1} parent=5 // pred_check
        _
      $region10: #{tpu_custom_call.1} parent=5 // pred_check_branch
        %160 = sbr.rel (%p157) target = $region12
      $region11: #{tpu_custom_call.1} parent=5 // pred_region
        %s161 = ssub.s32 %s13, 1
        // Predicated region
        $region13: #{tpu_custom_call.1} parent=11 // pred_check
          %p162 = pneg %p51
        $region14: #{tpu_custom_call.1} parent=11 // pred_check_branch
          %164 = sbr.rel (%p162) target = $region16
        $region15: #{tpu_custom_call.1} parent=11 // pred_region
          %p165 = scmp.lt.s32.totalorder %s22, 1
          %s166 = scalar_select %p165, %s22, 1
          %s167 = smul.addr %s166, 8
          %s168 = smul.addr %s167, 4
          %s169 = scalar_lea.vmem %s0, %s168
        $region16: #{tpu_custom_call.1} parent=11 // pred_fallthru
          _
        // Predicated region
        $region17: #{tpu_custom_call.1} parent=11 // pred_check
          %p170 = pneg %p77
        $region18: #{tpu_custom_call.1} parent=11 // pred_check_branch
          %172 = sbr.rel (%p170) target = $region20
        $region19: #{tpu_custom_call.1} parent=11 // pred_region
          %p173 = scmp.lt.s32.totalorder %s22, 1
          %s174 = scalar_select %p173, %s22, 1
          %s175 = smul.addr %s174, 8
          %s176 = smul.addr %s175, 4
          %s177 = scalar_lea.vmem %s1, %s176
        $region20: #{tpu_custom_call.1} parent=11 // pred_fallthru
          _
        // Predicated region
        $region21: #{tpu_custom_call.1} parent=11 // pred_check
          %p178 = pneg %p98
        $region22: #{tpu_custom_call.1} parent=11 // pred_check_branch
          %180 = sbr.rel (%p178) target = $region24
        $region23: #{tpu_custom_call.1} parent=11 // pred_region
          _
        $region24: #{tpu_custom_call.1} parent=11 // pred_fallthru
          _
        // Predicated region
        $region25: #{tpu_custom_call.1} parent=11 // pred_check
          %p181 = pneg %p119
        $region26: #{tpu_custom_call.1} parent=11 // pred_check_branch
          %183 = sbr.rel (%p181) target = $region28
        $region27: #{tpu_custom_call.1} parent=11 // pred_region
          _
        $region28: #{tpu_custom_call.1} parent=11 // pred_fallthru
          _
      $region12: #{tpu_custom_call.1} parent=5 // pred_fallthru
        _
      %p184 = scmp.lt.s32.totalorder %s13, 4
      // Predicated region
      $region29: #{tpu_custom_call.1} parent=5 // pred_check
        %p185 = pneg %p184
      $region30: #{tpu_custom_call.1} parent=5 // pred_check_branch
        %187 = sbr.rel (%p185) target = $region32
      $region31: #{tpu_custom_call.1} parent=5 // pred_region
        _
      $region32: #{tpu_custom_call.1} parent=5 // pred_fallthru
        _
      %p188 = scmp.le.s32.totalorder 1, %s13
      %p189 = scmp.lt.s32.totalorder %s13, 5
      %p190 = pnand %p188, %p189
      %p191 = pneg %p190
      // Predicated region
      $region33: #{tpu_custom_call.1} parent=5 // pred_check
        _
      $region34: #{tpu_custom_call.1} parent=5 // pred_check_branch
        %193 = sbr.rel (%p190) target = $region36
      $region35: #{tpu_custom_call.1} parent=5 // pred_region
        %s194 = ssub.s32 %s13, 1
        %p195 = scmp.lt.s32.totalorder %s22, 1
        %s196 = scalar_select %p195, %s22, 1
        %s197 = smul.addr %s196, 8
        %s198 = smul.addr %s197, 4
        %s199 = scalar_lea.vmem %s0, %s198
        %p200 = pneg %p51
        %p201 = pneg %p48
        %p202 = scmp.lt.s32.totalorder %s22, 1
        %s203 = scalar_select %p202, %s22, 1
        %s204 = smul.addr %s203, 8
        %s205 = smul.addr %s204, 4
        %s206 = scalar_lea.vmem %s1, %s205
        %p207 = pneg %p77
        %p208 = pneg %p74
        %p209 = pneg %p98
        %p210 = pneg %p95
        %p211 = pneg %p119
        %p212 = pneg %p116
        %p213 = pneg %p147
        %p214 = pneg %p144
        %s215 = sand.u32 %s134, 1
        %s216 = scalar_lea.sflag [#allocation6], %s215
        %s217 = sand.u32 %s134, 1
        %s218 = smul.addr %s217, 32
        %s219 = scalar_lea.vmem [#allocation5], %s218
        %p220 = scmp.lt.s32.totalorder %s22, 1
        %s221 = scalar_select %p220, %s22, 1
        %s222 = smul.addr %s221, 8
        %s223 = smul.addr %s222, 4
        %s224 = scalar_lea.vmem %s0, %s223
        %p225 = scmp.lt.s32.totalorder %s22, 1
        %s226 = scalar_select %p225, %s22, 1
        %s227 = smul.addr %s226, 8
        %s228 = smul.addr %s227, 4
        %s229 = scalar_lea.vmem %s1, %s228
        %s230 = smul.u32 4, %s23
        %p232 = scmp.eq.s32.totalorder %s23, 0
        // Predicated region
        $region37: #{tpu_custom_call.1} parent=35 // pred_check
          %p233 = pneg %p232
        $region38: #{tpu_custom_call.1} parent=35 // pred_check_branch
          %235 = sbr.rel (%p233) target = $region40
        $region39: #{tpu_custom_call.1} parent=35 // pred_region
          %v236 = vld [vmem:[%s224] sm:$0xf]
          %v237 = vld [vmem:[%s224 + $0x4] sm:$0xf]
          %v238 = vld [vmem:[%s224 + $0x8] sm:$0xf]
          %v239 = vld [vmem:[%s224 + $0xc] sm:$0xf]
          %v240 = vld [vmem:[%s224 + $0x10] sm:$0xf]
          %v241 = vld [vmem:[%s224 + $0x14] sm:$0xf]
          %v242 = vld [vmem:[%s224 + $0x18] sm:$0xf]
          %v243 = vld [vmem:[%s224 + $0x1c] sm:$0xf]
          %v244 = vld [vmem:[%s2] sm:$0xf]
          %v245 = vld [vmem:[%s2 + $0x4] sm:$0xf]
          %v246 = vld [vmem:[%s2 + $0x8] sm:$0xf]
          %v247 = vld [vmem:[%s2 + $0xc] sm:$0x3]
          %v256 = vunpack.c.l.b16 %v236
          %v257 = vunpack.c.l.b16 %v237
          %v258 = vunpack.c.l.b16 %v238
          %v259 = vunpack.c.l.b16 %v239
          %v260 = vunpack.c.l.b16 %v240
          %v261 = vunpack.c.l.b16 %v241
          %v262 = vunpack.c.l.b16 %v242
          %v263 = vunpack.c.l.b16 %v243
          %v264 = vpack.c.b16 %v257, %v256
          %v265 = vpack.c.b16 %v259, %v258
          %v266 = vpack.c.b16 %v261, %v260
          %v267 = vpack.c.b16 %v263, %v262
          %v272 = vunpack.c.l.b16 %v244
          %v273 = vunpack.c.l.b16 %v245
          %v274 = vunpack.c.l.b16 %v246
          %v275 = vunpack.c.l.b16 %v247
          %v276 = vpack.c.b16 %v273, %v272
          %v277 = vpack.c.b16 %v275, %v274
          %vm279 = vcmask 228352
          %v281 = vsel %vm279, %v264, 0
          %v284 = vsel %vm279, %v265, 0
          %v287 = vsel %vm279, %v266, 0
          %v290 = vsel %vm279, %v267, 0
          %vm292 = vcmask 1045504
          %v294 = vsel %vm292, %v277, 0
          %296 = vmatprep.subr.bf16.mxu0 0
          %297 = vmatpush1.bf16.msra.mxu0 0
          %298 = vmatprep.subr.bf16.mxu0 0
          %299 = vmatpush1.bf16.msra.mxu0 0
          %300 = vmatprep.subr.bf16.mxu0 0
          %301 = vmatpush1.bf16.msra.mxu0 0
          %302 = vmatprep.subr.bf16.mxu0 0
          %303 = vmatpush1.bf16.msra.mxu0 0
          %304 = vmatprep.subr.bf16.mxu0 0
          %305 = vmatpush1.bf16.msra.mxu0 0
          %306 = vmatprep.subr.bf16.mxu0 0
          %307 = vmatpush1.bf16.msra.mxu0 0
          %308 = vmatprep.subr.bf16.mxu0 0
          %309 = vmatpush1.bf16.msra.mxu0 %v294
          %310 = vmatprep.subr.bf16.mxu0 0
          %311 = vmatpush1.bf16.msra.mxu0 %v276
          %312 = vmatprep.subr.bf16.mxu0 0
          %313 = vmatpush2.bf16.msra.mxu0 0
          %314 = vmatprep.subr.bf16.mxu0 0
          %315 = vmatpush2.bf16.msra.mxu0 0
          %316 = vmatprep.subr.bf16.mxu0 0
          %317 = vmatpush2.bf16.msra.mxu0 0
          %318 = vmatprep.subr.bf16.mxu0 0
          %319 = vmatpush2.bf16.msra.mxu0 0
          %320 = vmatprep.subr.bf16.mxu0 0
          %321 = vmatpush2.bf16.msra.mxu0 0
          %322 = vmatprep.subr.bf16.mxu0 0
          %323 = vmatpush2.bf16.msra.mxu0 0
          %324 = vmatprep.subr.bf16.mxu0 0
          %325 = vmatpush2.bf16.msra.mxu0 0
          %326 = vmatprep.subr.bf16.mxu0 0
          %327 = vmatpush2.bf16.msra.mxu0 0
          %328 = vmatprep.mubr.bf16.mxu0 0
          %329 = vmatmul.mubr.bf16.gmra.mxu0 %v281
          %v330 = vpop.f32.mrf.mxu0
          %v331 = vadd.f32 0.0, %v330
          %v332 = vpop.f32.mrf.mxu0
          %v333 = vpop.f32.mrf.mxu0
          %v334 = vadd.f32 0.0, %v333
          %v335 = vpop.f32.mrf.mxu0
          %336 = vmatprep.mubr.bf16.mxu0 0
          %337 = vmatmul.mubr.bf16.gmra.mxu0 %v284
          %v338 = vpop.f32.mrf.mxu0
          %v339 = vadd.f32 0.0, %v338
          %v340 = vpop.f32.mrf.mxu0
          %v341 = vpop.f32.mrf.mxu0
          %v342 = vadd.f32 0.0, %v341
          %v343 = vpop.f32.mrf.mxu0
          %344 = vmatprep.mubr.bf16.mxu0 0
          %345 = vmatmul.mubr.bf16.gmra.mxu0 %v287
          %v346 = vpop.f32.mrf.mxu0
          %v347 = vadd.f32 0.0, %v346
          %v348 = vpop.f32.mrf.mxu0
          %v349 = vpop.f32.mrf.mxu0
          %v350 = vadd.f32 0.0, %v349
          %v351 = vpop.f32.mrf.mxu0
          %352 = vmatprep.mubr.bf16.mxu0 0
          %353 = vmatmul.mubr.bf16.gmra.mxu0 %v290
          %v354 = vpop.f32.mrf.mxu0
          %v355 = vadd.f32 0.0, %v354
          %v356 = vpop.f32.mrf.mxu0
          %v357 = vpop.f32.mrf.mxu0
          %v358 = vadd.f32 0.0, %v357
          %v359 = vpop.f32.mrf.mxu0
          %360 = vdwg.mxu0
          %v361 = vpack.c.bf16 %v334, %v331
          %v362 = vpack.c.bf16 %v342, %v339
          %v363 = vpack.c.bf16 %v350, %v347
          %v364 = vpack.c.bf16 %v358, %v355
          %v369 = vunpack.c.l.b16 %v361
          %v370 = vunpack.c.h.b16 %v361
          %v371 = vunpack.c.l.b16 %v362
          %v372 = vunpack.c.h.b16 %v362
          %v373 = vunpack.c.l.b16 %v363
          %v374 = vunpack.c.h.b16 %v363
          %v375 = vunpack.c.l.b16 %v364
          %v376 = vunpack.c.h.b16 %v364
          %v377 = vpack.c.b16 %v369, %v369
          %v378 = vpack.c.b16 %v370, %v370
          %v379 = vpack.c.b16 %v371, %v371
          %v380 = vpack.c.b16 %v372, %v372
          %v381 = vpack.c.b16 %v373, %v373
          %v382 = vpack.c.b16 %v374, %v374
          %v383 = vpack.c.b16 %v375, %v375
          %v384 = vpack.c.b16 %v376, %v376
          %393 = vst [vmem:[#allocation2] sm:$0xf] %v377
          %394 = vst [vmem:[#allocation2 + $0x4] sm:$0xf] %v378
          %395 = vst [vmem:[#allocation2 + $0x8] sm:$0xf] %v379
          %396 = vst [vmem:[#allocation2 + $0xc] sm:$0xf] %v380
          %397 = vst [vmem:[#allocation2 + $0x10] sm:$0xf] %v381
          %398 = vst [vmem:[#allocation2 + $0x14] sm:$0xf] %v382
          %399 = vst [vmem:[#allocation2 + $0x18] sm:$0xf] %v383
          %400 = vst [vmem:[#allocation2 + $0x1c] sm:$0xf] %v384
          %v401 = vld [vmem:[%s229] sm:$0xf]
          %v402 = vld [vmem:[%s229 + $0x4] sm:$0xf]
          %v403 = vld [vmem:[%s229 + $0x8] sm:$0xf]
          %v404 = vld [vmem:[%s229 + $0xc] sm:$0xf]
          %v405 = vld [vmem:[%s229 + $0x10] sm:$0xf]
          %v406 = vld [vmem:[%s229 + $0x14] sm:$0xf]
          %v407 = vld [vmem:[%s229 + $0x18] sm:$0xf]
          %v408 = vld [vmem:[%s229 + $0x1c] sm:$0xf]
          %v409 = vld [vmem:[%s3] sm:$0xff]
          %v410 = vld [vmem:[%s3 + $0x8] sm:$0xff]
          %v411 = vld [vmem:[%s3 + $0x10] sm:$0xff]
          %v412 = vld [vmem:[%s3 + $0x18] sm:$0xff]
          %v421 = vunpack.c.l.b16 %v401
          %v422 = vunpack.c.l.b16 %v402
          %v423 = vunpack.c.l.b16 %v403
          %v424 = vunpack.c.l.b16 %v404
          %v425 = vunpack.c.l.b16 %v405
          %v426 = vunpack.c.l.b16 %v406
          %v427 = vunpack.c.l.b16 %v407
          %v428 = vunpack.c.l.b16 %v408
          %v429 = vpack.c.b16 %v422, %v421
          %v430 = vpack.c.b16 %v424, %v423
          %v431 = vpack.c.b16 %v426, %v425
          %v432 = vpack.c.b16 %v428, %v427
          %v437 = vunpack.c.l.b16 %v409
          %v438 = vunpack.c.h.b16 %v409
          %v439 = vunpack.c.l.b16 %v410
          %v440 = vunpack.c.h.b16 %v410
          %v441 = vunpack.c.l.b16 %v411
          %v442 = vunpack.c.h.b16 %v411
          %v443 = vunpack.c.l.b16 %v412
          %v444 = vunpack.c.h.b16 %v412
          %v445 = vpack.c.b16 %v439, %v437
          %v446 = vpack.c.b16 %v440, %v438
          %v447 = vpack.c.b16 %v443, %v441
          %v448 = vpack.c.b16 %v444, %v442
          %vm453 = vcmask 261120
          %v455 = vsel %vm453, %v429, 0
          %v458 = vsel %vm453, %v430, 0
          %v461 = vsel %vm453, %v431, 0
          %v464 = vsel %vm453, %v432, 0
          %466 = vmatprep.subr.bf16.mxu0 0
          %467 = vmatpush1.bf16.msra.mxu0 0
          %468 = vmatprep.subr.bf16.mxu0 0
          %469 = vmatpush1.bf16.msra.mxu0 0
          %470 = vmatprep.subr.bf16.mxu0 0
          %471 = vmatpush1.bf16.msra.mxu0 0
          %472 = vmatprep.subr.bf16.mxu0 0
          %473 = vmatpush1.bf16.msra.mxu0 0
          %474 = vmatprep.subr.bf16.mxu0 0
          %475 = vmatpush1.bf16.msra.mxu0 0
          %476 = vmatprep.subr.bf16.mxu0 0
          %477 = vmatpush1.bf16.msra.mxu0 0
          %478 = vmatprep.subr.bf16.mxu0 %v448
          %479 = vmatpush1.bf16.msra.mxu0 %v447
          %480 = vmatprep.subr.bf16.mxu0 %v446
          %481 = vmatpush1.bf16.msra.mxu0 %v445
          %482 = vmatprep.subr.bf16.mxu0 0
          %483 = vmatpush2.bf16.msra.mxu0 0
          %484 = vmatprep.subr.bf16.mxu0 0
          %485 = vmatpush2.bf16.msra.mxu0 0
          %486 = vmatprep.subr.bf16.mxu0 0
          %487 = vmatpush2.bf16.msra.mxu0 0
          %488 = vmatprep.subr.bf16.mxu0 0
          %489 = vmatpush2.bf16.msra.mxu0 0
          %490 = vmatprep.subr.bf16.mxu0 0
          %491 = vmatpush2.bf16.msra.mxu0 0
          %492 = vmatprep.subr.bf16.mxu0 0
          %493 = vmatpush2.bf16.msra.mxu0 0
          %494 = vmatprep.subr.bf16.mxu0 0
          %495 = vmatpush2.bf16.msra.mxu0 0
          %496 = vmatprep.subr.bf16.mxu0 0
          %497 = vmatpush2.bf16.msra.mxu0 0
          %498 = vmatprep.mubr.bf16.mxu0 0
          %499 = vmatmul.mubr.bf16.gmra.mxu0 %v455
          %v500 = vpop.f32.mrf.mxu0
          %v501 = vadd.f32 0.0, %v500
          %v502 = vpop.f32.mrf.mxu0
          %v503 = vadd.f32 0.0, %v502
          %v504 = vpop.f32.mrf.mxu0
          %v505 = vadd.f32 0.0, %v504
          %v506 = vpop.f32.mrf.mxu0
          %v507 = vadd.f32 0.0, %v506
          %508 = vmatprep.mubr.bf16.mxu0 0
          %509 = vmatmul.mubr.bf16.gmra.mxu0 %v458
          %v510 = vpop.f32.mrf.mxu0
          %v511 = vadd.f32 0.0, %v510
          %v512 = vpop.f32.mrf.mxu0
          %v513 = vadd.f32 0.0, %v512
          %v514 = vpop.f32.mrf.mxu0
          %v515 = vadd.f32 0.0, %v514
          %v516 = vpop.f32.mrf.mxu0
          %v517 = vadd.f32 0.0, %v516
          %518 = vmatprep.mubr.bf16.mxu0 0
          %519 = vmatmul.mubr.bf16.gmra.mxu0 %v461
          %v520 = vpop.f32.mrf.mxu0
          %v521 = vadd.f32 0.0, %v520
          %v522 = vpop.f32.mrf.mxu0
          %v523 = vadd.f32 0.0, %v522
          %v524 = vpop.f32.mrf.mxu0
          %v525 = vadd.f32 0.0, %v524
          %v526 = vpop.f32.mrf.mxu0
          %v527 = vadd.f32 0.0, %v526
          %528 = vmatprep.mubr.bf16.mxu0 0
          %529 = vmatmul.mubr.bf16.gmra.mxu0 %v464
          %v530 = vpop.f32.mrf.mxu0
          %v531 = vadd.f32 0.0, %v530
          %v532 = vpop.f32.mrf.mxu0
          %v533 = vadd.f32 0.0, %v532
          %v534 = vpop.f32.mrf.mxu0
          %v535 = vadd.f32 0.0, %v534
          %v536 = vpop.f32.mrf.mxu0
          %v537 = vadd.f32 0.0, %v536
          %538 = vdwg.mxu0
          %v539 = vpack.c.bf16 %v505, %v501
          %v540 = vpack.c.bf16 %v515, %v511
          %v541 = vpack.c.bf16 %v525, %v521
          %v542 = vpack.c.bf16 %v535, %v531
          %v547 = vunpack.c.l.b16 %v539
          %v548 = vunpack.c.h.b16 %v539
          %v549 = vunpack.c.l.b16 %v540
          %v550 = vunpack.c.h.b16 %v540
          %v551 = vunpack.c.l.b16 %v541
          %v552 = vunpack.c.h.b16 %v541
          %v553 = vunpack.c.l.b16 %v542
          %v554 = vunpack.c.h.b16 %v542
          %v555 = vpack.c.b16 %v547, %v547
          %v556 = vpack.c.b16 %v548, %v548
          %v557 = vpack.c.b16 %v549, %v549
          %v558 = vpack.c.b16 %v550, %v550
          %v559 = vpack.c.b16 %v551, %v551
          %v560 = vpack.c.b16 %v552, %v552
          %v561 = vpack.c.b16 %v553, %v553
          %v562 = vpack.c.b16 %v554, %v554
          %571 = vst [vmem:[#allocation3] sm:$0xf] %v555
          %572 = vst [vmem:[#allocation3 + $0x4] sm:$0xf] %v556
          %573 = vst [vmem:[#allocation3 + $0x8] sm:$0xf] %v557
          %574 = vst [vmem:[#allocation3 + $0xc] sm:$0xf] %v558
          %575 = vst [vmem:[#allocation3 + $0x10] sm:$0xf] %v559
          %576 = vst [vmem:[#allocation3 + $0x14] sm:$0xf] %v560
          %577 = vst [vmem:[#allocation3 + $0x18] sm:$0xf] %v561
          %578 = vst [vmem:[#allocation3 + $0x1c] sm:$0xf] %v562
          %v579 = vunpack.c.l.bf16 %v236
          %v580 = vunpack.c.l.bf16 %v237
          %v581 = vunpack.c.l.bf16 %v238
          %v582 = vunpack.c.l.bf16 %v239
          %v583 = vunpack.c.l.bf16 %v240
          %v584 = vunpack.c.l.bf16 %v241
          %v585 = vunpack.c.l.bf16 %v242
          %v586 = vunpack.c.l.bf16 %v243
          %588 = vset.pattern.permute.xlu0 27
          %589 = vperm.xlu0 %588, %v579
          %v590 = vpop.permute.xlu0 %589
          %593 = vset.pattern.permute.xlu0 27
          %594 = vperm.xlu0 %593, %v580
          %v595 = vpop.permute.xlu0 %594
          %598 = vset.pattern.permute.xlu0 27
          %599 = vperm.xlu0 %598, %v581
          %v600 = vpop.permute.xlu0 %599
          %603 = vset.pattern.permute.xlu0 27
          %604 = vperm.xlu0 %603, %v582
          %v605 = vpop.permute.xlu0 %604
          %608 = vset.pattern.permute.xlu0 27
          %609 = vperm.xlu0 %608, %v583
          %v610 = vpop.permute.xlu0 %609
          %613 = vset.pattern.permute.xlu0 27
          %614 = vperm.xlu0 %613, %v584
          %v615 = vpop.permute.xlu0 %614
          %618 = vset.pattern.permute.xlu0 27
          %619 = vperm.xlu0 %618, %v585
          %v620 = vpop.permute.xlu0 %619
          %623 = vset.pattern.permute.xlu0 27
          %624 = vperm.xlu0 %623, %v586
          %v625 = vpop.permute.xlu0 %624
          %v627 = vmul.f32 %v590, %v503
          %v628 = vmul.f32 %v595, %v507
          %v629 = vmul.f32 %v600, %v513
          %v630 = vmul.f32 %v605, %v517
          %v631 = vmul.f32 %v610, %v523
          %v632 = vmul.f32 %v615, %v527
          %v633 = vmul.f32 %v620, %v533
          %v634 = vmul.f32 %v625, %v537
          %v635 = vlaneseq
          %v636 = vand.u32 %v635, 127
          %vm637 = vcmp.eq.s32.totalorder %v636, 32
          %v638 = vsel %vm637, 1.0, %v627
          %v639 = vsel %vm637, 1.0, %v628
          %v640 = vsel %vm637, 1.0, %v629
          %v641 = vsel %vm637, 1.0, %v630
          %v642 = vsel %vm637, 1.0, %v631
          %v643 = vsel %vm637, 1.0, %v632
          %v644 = vsel %vm637, 1.0, %v633
          %v645 = vsel %vm637, 1.0, %v634
          %v646 = vpack.c.bf16 %v639, %v638
          %v647 = vpack.c.bf16 %v641, %v640
          %v648 = vpack.c.bf16 %v643, %v642
          %v649 = vpack.c.bf16 %v645, %v644
          %v654 = vunpack.c.l.b16 %v646
          %v655 = vunpack.c.h.b16 %v646
          %v656 = vunpack.c.l.b16 %v647
          %v657 = vunpack.c.h.b16 %v647
          %v658 = vunpack.c.l.b16 %v648
          %v659 = vunpack.c.h.b16 %v648
          %v660 = vunpack.c.l.b16 %v649
          %v661 = vunpack.c.h.b16 %v649
          %v662 = vpack.c.b16 %v654, %v654
          %v663 = vpack.c.b16 %v655, %v655
          %v664 = vpack.c.b16 %v656, %v656
          %v665 = vpack.c.b16 %v657, %v657
          %v666 = vpack.c.b16 %v658, %v658
          %v667 = vpack.c.b16 %v659, %v659
          %v668 = vpack.c.b16 %v660, %v660
          %v669 = vpack.c.b16 %v661, %v661
          %678 = vst [vmem:[#allocation4] sm:$0xf] %v662
          %679 = vst [vmem:[#allocation4 + $0x4] sm:$0xf] %v663
          %680 = vst [vmem:[#allocation4 + $0x8] sm:$0xf] %v664
          %681 = vst [vmem:[#allocation4 + $0xc] sm:$0xf] %v665
          %682 = vst [vmem:[#allocation4 + $0x10] sm:$0xf] %v666
          %683 = vst [vmem:[#allocation4 + $0x14] sm:$0xf] %v667
          %684 = vst [vmem:[#allocation4 + $0x18] sm:$0xf] %v668
          %685 = vst [vmem:[#allocation4 + $0x1c] sm:$0xf] %v669
        $region40: #{tpu_custom_call.1} parent=35 // pred_fallthru
          _
        %s686 = smul.u32 %s23, 32
        %s687 = sshra.s32 %s686, 3
        %s688 = sand.u32 %s686, 7
        %s689 = smul.addr %s687, 4
        %s690 = scalar_lea.vmem [#allocation3], %s689
        %v691 = vld [vmem:[%s690] sm:$0xf]
        %v692 = vld [vmem:[%s690 + $0x4] sm:$0xf]
        %v693 = vld [vmem:[%s690 + $0x8] sm:$0xf]
        %v694 = vld [vmem:[%s690 + $0xc] sm:$0xf]
        %v695 = vld [vmem:[#allocation2] sm:$0xf]
        %v696 = vld [vmem:[#allocation2 + $0x4] sm:$0xf]
        %v697 = vld [vmem:[#allocation2 + $0x8] sm:$0xf]
        %v698 = vld [vmem:[#allocation2 + $0xc] sm:$0xf]
        %v699 = vld [vmem:[#allocation2 + $0x10] sm:$0xf]
        %v700 = vld [vmem:[#allocation2 + $0x14] sm:$0xf]
        %v701 = vld [vmem:[#allocation2 + $0x18] sm:$0xf]
        %v702 = vld [vmem:[#allocation2 + $0x1c] sm:$0xf]
        %v707 = vunpack.c.l.b16 %v691
        %v708 = vunpack.c.l.b16 %v692
        %v709 = vunpack.c.l.b16 %v693
        %v710 = vunpack.c.l.b16 %v694
        %v711 = vpack.c.b16 %v708, %v707
        %v712 = vpack.c.b16 %v710, %v709
        %v723 = vunpack.c.l.b16 %v695
        %v724 = vunpack.c.l.b16 %v696
        %v725 = vunpack.c.l.b16 %v697
        %v726 = vunpack.c.l.b16 %v698
        %v727 = vunpack.c.l.b16 %v699
        %v728 = vunpack.c.l.b16 %v700
        %v729 = vunpack.c.l.b16 %v701
        %v730 = vunpack.c.l.b16 %v702
        %v731 = vpack.c.b16 %v724, %v723
        %v732 = vpack.c.b16 %v726, %v725
        %v733 = vpack.c.b16 %v728, %v727
        %v734 = vpack.c.b16 %v730, %v729
        %739 = vmatprep.subr.bf16.mxu0 0
        %740 = vmatpush1.bf16.xpose.msra.mxu0 0
        %741 = vmatprep.subr.bf16.mxu0 0
        %742 = vmatpush1.bf16.xpose.msra.mxu0 0
        %743 = vmatprep.subr.bf16.mxu0 0
        %744 = vmatpush1.bf16.xpose.msra.mxu0 0
        %745 = vmatprep.subr.bf16.mxu0 0
        %746 = vmatpush1.bf16.xpose.msra.mxu0 0
        %747 = vmatprep.subr.bf16.mxu0 0
        %748 = vmatpush1.bf16.xpose.msra.mxu0 %v734
        %749 = vmatprep.subr.bf16.mxu0 0
        %750 = vmatpush1.bf16.xpose.msra.mxu0 %v733
        %751 = vmatprep.subr.bf16.mxu0 0
        %752 = vmatpush1.bf16.xpose.msra.mxu0 %v732
        %753 = vmatprep.subr.bf16.mxu0 0
        %754 = vmatpush1.bf16.xpose.msra.mxu0 %v731
        %755 = vmatprep.subr.bf16.mxu0 0
        %756 = vmatpush2.bf16.xpose.msra.mxu0 0
        %757 = vmatprep.subr.bf16.mxu0 0
        %758 = vmatpush2.bf16.xpose.msra.mxu0 0
        %759 = vmatprep.subr.bf16.mxu0 0
        %760 = vmatpush2.bf16.xpose.msra.mxu0 0
        %761 = vmatprep.subr.bf16.mxu0 0
        %762 = vmatpush2.bf16.xpose.msra.mxu0 0
        %763 = vmatprep.subr.bf16.mxu0 0
        %764 = vmatpush2.bf16.xpose.msra.mxu0 0
        %765 = vmatprep.subr.bf16.mxu0 0
        %766 = vmatpush2.bf16.xpose.msra.mxu0 0
        %767 = vmatprep.subr.bf16.mxu0 0
        %768 = vmatpush2.bf16.xpose.msra.mxu0 0
        %769 = vmatprep.subr.bf16.mxu0 0
        %770 = vmatpush2.bf16.xpose.msra.mxu0 0
        %771 = vmatprep.mubr.bf16.mxu0 0
        %772 = vmatmul.mubr.bf16.gmra.mxu0 %v711
        %v773 = vpop.f32.mrf.mxu0
        %v774 = vadd.f32 0.0, %v773
        %v775 = vpop.f32.mrf.mxu0
        %v776 = vpop.f32.mrf.mxu0
        %v777 = vadd.f32 0.0, %v776
        %v778 = vpop.f32.mrf.mxu0
        %779 = vmatprep.mubr.bf16.mxu0 0
        %780 = vmatmul.mubr.bf16.gmra.mxu0 %v712
        %v781 = vpop.f32.mrf.mxu0
        %v782 = vadd.f32 0.0, %v781
        %v783 = vpop.f32.mrf.mxu0
        %v784 = vpop.f32.mrf.mxu0
        %v785 = vadd.f32 0.0, %v784
        %v786 = vpop.f32.mrf.mxu0
        %787 = vdwg.mxu0
        %vm788 = vcmask 523264
        %v789 = vsel %vm788, %v774, -inf
        %790 = vmax.xlane.f32.xlu0 %v789
        %v791 = vpop.xlane.xlu0 %790
        %v792 = vsel %vm788, %v777, -inf
        %793 = vmax.xlane.f32.xlu0 %v792
        %v794 = vpop.xlane.xlu0 %793
        %v795 = vsel %vm788, %v782, -inf
        %796 = vmax.xlane.f32.xlu0 %v795
        %v797 = vpop.xlane.xlu0 %796
        %v798 = vsel %vm788, %v785, -inf
        %799 = vmax.xlane.f32.xlu0 %v798
        %v800 = vpop.xlane.xlu0 %799
        %v801 = vsub.f32 %v774, %v791
        %v802 = vsub.f32 %v777, %v794
        %v803 = vsub.f32 %v782, %v797
        %v804 = vsub.f32 %v785, %v800
        %v805 = vpack.c.bf16 %v802, %v801
        %v806 = vpack.c.bf16 %v804, %v803
        %v808 = vmul.bf16 %v805, 1069105081
        %v809 = vpow.bf16.pop %v808
        %v811 = vmul.bf16 %v806, 1069105081
        %v812 = vpow.bf16.pop %v811
        %v813 = vld [vmem:[#allocation4] sm:$0xf]
        %v814 = vld [vmem:[#allocation4 + $0x4] sm:$0xf]
        %v815 = vld [vmem:[#allocation4 + $0x8] sm:$0xf]
        %v816 = vld [vmem:[#allocation4 + $0xc] sm:$0xf]
        %v817 = vld [vmem:[#allocation4 + $0x10] sm:$0xf]
        %v818 = vld [vmem:[#allocation4 + $0x14] sm:$0xf]
        %v819 = vld [vmem:[#allocation4 + $0x18] sm:$0xf]
        %v820 = vld [vmem:[#allocation4 + $0x1c] sm:$0xf]
        %v829 = vunpack.c.l.b16 %v813
        %v830 = vunpack.c.l.b16 %v814
        %v831 = vunpack.c.l.b16 %v815
        %v832 = vunpack.c.l.b16 %v816
        %v833 = vunpack.c.l.b16 %v817
        %v834 = vunpack.c.l.b16 %v818
        %v835 = vunpack.c.l.b16 %v819
        %v836 = vunpack.c.l.b16 %v820
        %v837 = vpack.c.b16 %v830, %v829
        %v838 = vpack.c.b16 %v832, %v831
        %v839 = vpack.c.b16 %v834, %v833
        %v840 = vpack.c.b16 %v836, %v835
        %v846 = vsel %vm788, %v809, 0
        %v849 = vsel %vm788, %v812, 0
        %851 = vmatprep.subr.bf16.mxu0 0
        %852 = vmatpush1.bf16.msra.mxu0 0
        %853 = vmatprep.subr.bf16.mxu0 0
        %854 = vmatpush1.bf16.msra.mxu0 0
        %855 = vmatprep.subr.bf16.mxu0 0
        %856 = vmatpush1.bf16.msra.mxu0 0
        %857 = vmatprep.subr.bf16.mxu0 0
        %858 = vmatpush1.bf16.msra.mxu0 0
        %859 = vmatprep.subr.bf16.mxu0 0
        %860 = vmatpush1.bf16.msra.mxu0 %v840
        %861 = vmatprep.subr.bf16.mxu0 0
        %862 = vmatpush1.bf16.msra.mxu0 %v839
        %863 = vmatprep.subr.bf16.mxu0 0
        %864 = vmatpush1.bf16.msra.mxu0 %v838
        %865 = vmatprep.subr.bf16.mxu0 0
        %866 = vmatpush1.bf16.msra.mxu0 %v837
        %867 = vmatprep.subr.bf16.mxu0 0
        %868 = vmatpush2.bf16.msra.mxu0 0
        %869 = vmatprep.subr.bf16.mxu0 0
        %870 = vmatpush2.bf16.msra.mxu0 0
        %871 = vmatprep.subr.bf16.mxu0 0
        %872 = vmatpush2.bf16.msra.mxu0 0
        %873 = vmatprep.subr.bf16.mxu0 0
        %874 = vmatpush2.bf16.msra.mxu0 0
        %875 = vmatprep.subr.bf16.mxu0 0
        %876 = vmatpush2.bf16.msra.mxu0 0
        %877 = vmatprep.subr.bf16.mxu0 0
        %878 = vmatpush2.bf16.msra.mxu0 0
        %879 = vmatprep.subr.bf16.mxu0 0
        %880 = vmatpush2.bf16.msra.mxu0 0
        %881 = vmatprep.subr.bf16.mxu0 0
        %882 = vmatpush2.bf16.msra.mxu0 0
        %883 = vmatprep.mubr.bf16.mxu0 0
        %884 = vmatmul.mubr.bf16.gmra.mxu0 %v846
        %v885 = vpop.f32.mrf.mxu0
        %v886 = vadd.f32 0.0, %v885
        %v887 = vpop.f32.mrf.mxu0
        %v888 = vpop.f32.mrf.mxu0
        %v889 = vadd.f32 0.0, %v888
        %v890 = vpop.f32.mrf.mxu0
        %891 = vmatprep.mubr.bf16.mxu0 0
        %892 = vmatmul.mubr.bf16.gmra.mxu0 %v849
        %v893 = vpop.f32.mrf.mxu0
        %v894 = vadd.f32 0.0, %v893
        %v895 = vpop.f32.mrf.mxu0
        %v896 = vpop.f32.mrf.mxu0
        %v897 = vadd.f32 0.0, %v896
        %v898 = vpop.f32.mrf.mxu0
        %899 = vdwg.mxu0
        %v900 = vrcp.pop %v886
        %v901 = vrcp.pop %v889
        %v902 = vrcp.pop %v894
        %v903 = vrcp.pop %v897
        %905 = vset.pattern.permute.xlu0 32
        %906 = vperm.xlu0 %905, %v900
        %v907 = vpop.permute.xlu0 %906
        %910 = vset.pattern.permute.xlu0 32
        %911 = vperm.xlu0 %910, %v901
        %v912 = vpop.permute.xlu0 %911
        %915 = vset.pattern.permute.xlu0 32
        %916 = vperm.xlu0 %915, %v902
        %v917 = vpop.permute.xlu0 %916
        %920 = vset.pattern.permute.xlu0 32
        %921 = vperm.xlu0 %920, %v903
        %v922 = vpop.permute.xlu0 %921
        %v924 = vmul.f32 %v886, %v907
        %v925 = vmul.f32 %v889, %v912
        %v926 = vmul.f32 %v894, %v917
        %v927 = vmul.f32 %v897, %v922
        %928 = vst [vmem:[%s219] sm:$0xff] %v924
        %929 = vst [vmem:[%s219 + $0x8] sm:$0xff] %v925
        %930 = vst [vmem:[%s219 + $0x10] sm:$0xff] %v926
        %931 = vst [vmem:[%s219 + $0x18] sm:$0xff] %v927
        %s932 = sand.u32 %s134, 1
        %s933 = scalar_lea.sflag [#allocation6], %s932
        %s934 = sand.u32 %s134, 1
        %s935 = smul.addr %s934, 32
        %s936 = scalar_lea.vmem [#allocation5], %s935
        // Predicated region
        $region41: #{tpu_custom_call.1} parent=35 // pred_check
          %p937 = pneg %p144
        $region42: #{tpu_custom_call.1} parent=35 // pred_check_branch
          %939 = sbr.rel (%p937) target = $region44
        $region43: #{tpu_custom_call.1} parent=35 // pred_region
          %s940 = smul.u32 4, %s23
          %s942 = ssub.s32 512, 512
          %943 = vsyncadd %s933, %s942
          %s944 = smul.addr %s22, 8
          %s945 = sadd.s32 %s940, %s944
          %s946 = smul.addr %s945, 128
          %s947 = scalar_lea.hbm %s4, %s946
          %s948 = sshll.u32 %s936, 4
          %s949 = int_to_ptr.vmem [resolvable:$true] %s948
          %954 = dma.vmem_to_hbm [thread:$0]  %s949, 512, %s947, %s933, 128, 128, 8
        $region44: #{tpu_custom_call.1} parent=35 // pred_fallthru
          _
      $region36: #{tpu_custom_call.1} parent=5 // pred_fallthru
        _
      %p955 = scmp.le.s32.totalorder 2, %s13
      // Predicated region
      $region45: #{tpu_custom_call.1} parent=5 // pred_check
        %p956 = pneg %p955
      $region46: #{tpu_custom_call.1} parent=5 // pred_check_branch
        %958 = sbr.rel (%p956) target = $region48
      $region47: #{tpu_custom_call.1} parent=5 // pred_region
        %s959 = ssub.s32 %s13, 2
        // Predicated region
        $region49: #{tpu_custom_call.1} parent=47 // pred_check
          %p960 = pneg %p150
        $region50: #{tpu_custom_call.1} parent=47 // pred_check_branch
          %962 = sbr.rel (%p960) target = $region52
        $region51: #{tpu_custom_call.1} parent=47 // pred_region
          %s963 = sand.u32 %s135, 1
          %s964 = scalar_lea.sflag [#allocation6], %s963
          %s965 = sand.u32 %s135, 1
          %s966 = smul.addr %s965, 32
          %s967 = scalar_lea.vmem [#allocation5], %s966
          %968 = dma.done %s964, 512
        $region52: #{tpu_custom_call.1} parent=47 // pred_fallthru
          _
      $region48: #{tpu_custom_call.1} parent=5 // pred_fallthru
        _
    $region6: #{tpu_custom_call.1} parent=1 // loop_footer
      %s17 = sadd.s32 1, %s13
    $region7: #{tpu_custom_call.1} parent=1 // loop_footer_branch
      %12 = sbr.rel target = $region3
    $region8: #{tpu_custom_call.1} parent=1 // loop_exit
      _
    %969 = vsyncpa [#allocation6], 1
    %s970 = scalar_lea.sflag [#allocation6], 1
    %971 = vsyncpa %s970, 1

// kernel: tpu_custom_call.1
$region0: #{tpu_custom_call.1}
  #allocation0 [shape = 'u32[]', space=smem, size = 0x4, offset = 0x4, fixed_abs, tag = 'smem constant byte address 0x4 - core index']
  #allocation1 [shape = 'u32[144,128]{1,0:T(1,128)}', space=vmem, size = 0x12000, scoped, tag = 'internal scratch']
  #allocation2 [shape = 'bf16[64,128]{1,0:T(8,128)(2,1)}', space=vmem, size = 0x4000, scoped, tag = 'scratch operand']
  #allocation3 [shape = 'bf16[64,128]{1,0:T(8,128)(2,1)}', space=vmem, size = 0x4000, scoped, tag = 'scratch operand']
  #allocation4 [shape = 'bf16[64,128]{1,0:T(8,128)(2,1)}', space=vmem, size = 0x4000, scoped, tag = 'scratch operand']
  %s0 = inlined_call_operand.vmem [shape: bf16[2,64,28], index: 0, kind: input, shape index: {}]
  %s1 = inlined_call_operand.vmem [shape: bf16[2,64,32], index: 1, kind: input, shape index: {}]
  %s2 = inlined_call_operand.vmem [shape: bf16[28,128], index: 2, kind: input, shape index: {}]
  %s3 = inlined_call_operand.vmem [shape: bf16[32,256], index: 3, kind: input, shape index: {}]
  %s4 = inlined_call_operand.hbm [shape: f32[2,64,128], index: 4, kind: output, shape index: {}]
  %s5 = sld [smem:[#allocation0]]
  $region53: #{tpu_custom_call.1} parent=0
    _
  %s7 = ssub.s32 1, %s5
  %s8 = scalar_select 0, %s7, %s5
  $region1: #{tpu_custom_call.1} parent=0
    #allocation5 [shape = 'u8[32768]{0}', space=vmem, size = 0x8000, scoped, tag = 'output window, operand 0']
    #allocation6 [shape = 's32[2]{0}', space=sflag, size = 0x8, scoped, tag = 'scoped memory for tpu_custom_call.1']
    %9 = vsyncpa [#allocation6], 0
    %s10 = scalar_lea.sflag [#allocation6], 1
    %11 = vsyncpa %s10, 0
    loop: start=0, step=1, limit=6
    $region2: #{tpu_custom_call.1} parent=1 // loop_pre_header
      _
    $region3: #{tpu_custom_call.1} parent=1 // loop_header
      %s13 = sphi 0, %s17
      %p14 = scmp.ge.s32.totalorder %s13, 6
      %s20 = sphi 0, %s32
      %s21 = sphi 0, %s28
      %s22 = sphi 0, %s20
      %s23 = sphi 0, %s21
      %s24 = sphi 0, %s22
      %s25 = sphi 0, %s23
      %s35 = sphi 0, %s37
      %s38 = sphi 0, %s35
      %s39 = sphi 0, %s38
      %s55 = sphi 0, %s39
      %s61 = sphi 0, %s63
      %s64 = sphi 0, %s61
      %s65 = sphi 0, %s64
      %s81 = sphi 0, %s65
      %s85 = sphi 0, %s85
      %s87 = sphi 0, %s85
      %s88 = sphi 0, %s87
      %s102 = sphi 0, %s88
      %s106 = sphi 0, %s106
      %s108 = sphi 0, %s106
      %s109 = sphi 0, %s108
      %s123 = sphi 0, %s109
      %s131 = sphi 0, %s133
      %s134 = sphi 0, %s131
      %s135 = sphi 0, %s134
      %s151 = sphi 0, %s135
    $region4: #{tpu_custom_call.1} parent=1 // loop_header_branch
      %16 = sbr.rel (%p14) target = $region8
    $region5: #{tpu_custom_call.1} parent=1 // loop_body
      %s18 = ssub.s32 %s13, 1
      %s19 = ssub.s32 %s13, 2
      %s26 = sadd.s32 1, %s21
      %p27 = scmp.ge.s32.totalorder %s26, 2
      %s28 = scalar_select %p27, 0, %s26
      %s29 = sadd.s32 1, %s20
      %s30 = scalar_select %p27, %s29, %s20
      %p31 = scmp.ge.s32.totalorder %s30, 2
      %s32 = scalar_select %p31, 0, %s30
      %s33 = ssub.s32 %s20, %s32
      %p34 = scmp.eq.s32.totalorder %s33, 0
      %s36 = sadd.s32 %s35, 1
      %s37 = scalar_select %p34, %s35, %s36
      %p40 = pneg %p34
      %p41 = scmp.eq.s32.totalorder %s13, 3
      %p42 = por %p40, %p41
      %p43 = scmp.ne.s32.totalorder %s35, %s38
      %p44 = scmp.eq.s32.totalorder %s13, 0
      %p45 = por %p43, %p44
      %p46 = scmp.ne.s32.totalorder %s35, %s38
      %p47 = scmp.eq.s32.totalorder %s18, 3
      %p48 = por %p46, %p47
      %p49 = scmp.ne.s32.totalorder %s38, %s39
      %p50 = scmp.eq.s32.totalorder %s18, 0
      %p51 = por %p49, %p50
      %p52 = scmp.ne.s32.totalorder %s38, %s39
      %p53 = scmp.eq.s32.totalorder %s19, 3
      %p54 = por %p52, %p53
      %p56 = scmp.ne.s32.totalorder %s39, %s55
      %p57 = scmp.eq.s32.totalorder %s19, 0
      %p58 = por %p56, %p57
      %s59 = ssub.s32 %s20, %s32
      %p60 = scmp.eq.s32.totalorder %s59, 0
      %s62 = sadd.s32 %s61, 1
      %s63 = scalar_select %p60, %s61, %s62
      %p66 = pneg %p60
      %p67 = scmp.eq.s32.totalorder %s13, 3
      %p68 = por %p66, %p67
      %p69 = scmp.ne.s32.totalorder %s61, %s64
      %p70 = scmp.eq.s32.totalorder %s13, 0
      %p71 = por %p69, %p70
      %p72 = scmp.ne.s32.totalorder %s61, %s64
      %p73 = scmp.eq.s32.totalorder %s18, 3
      %p74 = por %p72, %p73
      %p75 = scmp.ne.s32.totalorder %s64, %s65
      %p76 = scmp.eq.s32.totalorder %s18, 0
      %p77 = por %p75, %p76
      %p78 = scmp.ne.s32.totalorder %s64, %s65
      %p79 = scmp.eq.s32.totalorder %s19, 3
      %p80 = por %p78, %p79
      %p82 = scmp.ne.s32.totalorder %s65, %s81
      %p83 = scmp.eq.s32.totalorder %s19, 0
      %p84 = por %p82, %p83
      %s86 = sadd.s32 %s85, 1
      %p89 = scmp.eq.s32.totalorder %s13, 3
      %p90 = scmp.ne.s32.totalorder %s85, %s87
      %p91 = scmp.eq.s32.totalorder %s13, 0
      %p92 = por %p90, %p91
      %p93 = scmp.ne.s32.totalorder %s85, %s87
      %p94 = scmp.eq.s32.totalorder %s18, 3
      %p95 = por %p93, %p94
      %p96 = scmp.ne.s32.totalorder %s87, %s88
      %p97 = scmp.eq.s32.totalorder %s18, 0
      %p98 = por %p96, %p97
      %p99 = scmp.ne.s32.totalorder %s87, %s88
      %p100 = scmp.eq.s32.totalorder %s19, 3
      %p101 = por %p99, %p100
      %p103 = scmp.ne.s32.totalorder %s88, %s102
      %p104 = scmp.eq.s32.totalorder %s19, 0
      %p105 = por %p103, %p104
      %s107 = sadd.s32 %s106, 1
      %p110 = scmp.eq.s32.totalorder %s13, 3
      %p111 = scmp.ne.s32.totalorder %s106, %s108
      %p112 = scmp.eq.s32.totalorder %s13, 0
      %p113 = por %p111, %p112
      %p114 = scmp.ne.s32.totalorder %s106, %s108
      %p115 = scmp.eq.s32.totalorder %s18, 3
      %p116 = por %p114, %p115
      %p117 = scmp.ne.s32.totalorder %s108, %s109
      %p118 = scmp.eq.s32.totalorder %s18, 0
      %p119 = por %p117, %p118
      %p120 = scmp.ne.s32.totalorder %s108, %s109
      %p121 = scmp.eq.s32.totalorder %s19, 3
      %p122 = por %p120, %p121
      %p124 = scmp.ne.s32.totalorder %s109, %s123
      %p125 = scmp.eq.s32.totalorder %s19, 0
      %p126 = por %p124, %p125
      %s127 = ssub.s32 %s20, %s32
      %s128 = ssub.s32 %s21, %s28
      %s129 = sor.u32 %s127, %s128
      %p130 = scmp.eq.s32.totalorder %s129, 0
      %s132 = sadd.s32 %s131, 1
      %s133 = scalar_select %p130, %s131, %s132
      %p136 = pneg %p130
      %p137 = scmp.eq.s32.totalorder %s13, 3
      %p138 = por %p136, %p137
      %p139 = scmp.ne.s32.totalorder %s131, %s134
      %p140 = scmp.eq.s32.totalorder %s13, 0
      %p141 = por %p139, %p140
      %p142 = scmp.ne.s32.totalorder %s131, %s134
      %p143 = scmp.eq.s32.totalorder %s18, 3
      %p144 = por %p142, %p143
      %p145 = scmp.ne.s32.totalorder %s134, %s135
      %p146 = scmp.eq.s32.totalorder %s18, 0
      %p147 = por %p145, %p146
      %p148 = scmp.ne.s32.totalorder %s134, %s135
      %p149 = scmp.eq.s32.totalorder %s19, 3
      %p150 = por %p148, %p149
      %p152 = scmp.ne.s32.totalorder %s135, %s151
      %p153 = scmp.eq.s32.totalorder %s19, 0
      %p154 = por %p152, %p153
      %p155 = scmp.le.s32.totalorder 1, %s13
      %p156 = scmp.lt.s32.totalorder %s13, 5
      %p157 = pnand %p155, %p156
      %p158 = pneg %p157
      // Predicated region
      $region9: #{tpu_custom_call.1} parent=5 // pred_check
        _
      $region10: #{tpu_custom_call.1} parent=5 // pred_check_branch
        %160 = sbr.rel (%p157) target = $region12
      $region11: #{tpu_custom_call.1} parent=5 // pred_region
        %s161 = ssub.s32 %s13, 1
        // Predicated region
        $region13: #{tpu_custom_call.1} parent=11 // pred_check
          %p162 = pneg %p98
        $region14: #{tpu_custom_call.1} parent=11 // pred_check_branch
          %164 = sbr.rel (%p162) target = $region16
        $region15: #{tpu_custom_call.1} parent=11 // pred_region
          _
        $region16: #{tpu_custom_call.1} parent=11 // pred_fallthru
          _
        // Predicated region
        $region17: #{tpu_custom_call.1} parent=11 // pred_check
          %p165 = pneg %p119
        $region18: #{tpu_custom_call.1} parent=11 // pred_check_branch
          %167 = sbr.rel (%p165) target = $region20
        $region19: #{tpu_custom_call.1} parent=11 // pred_region
          _
        $region20: #{tpu_custom_call.1} parent=11 // pred_fallthru
          _
      $region12: #{tpu_custom_call.1} parent=5 // pred_fallthru
        _
      %p168 = scmp.lt.s32.totalorder %s13, 4
      // Predicated region
      $region21: #{tpu_custom_call.1} parent=5 // pred_check
        %p169 = pneg %p168
      $region22: #{tpu_custom_call.1} parent=5 // pred_check_branch
        %171 = sbr.rel (%p169) target = $region24
      $region23: #{tpu_custom_call.1} parent=5 // pred_region
        // Predicated region
        $region25: #{tpu_custom_call.1} parent=23 // pred_check
          %p172 = pneg %p45
        $region26: #{tpu_custom_call.1} parent=23 // pred_check_branch
          %174 = sbr.rel (%p172) target = $region28
        $region27: #{tpu_custom_call.1} parent=23 // pred_region
          %p175 = scmp.lt.s32.totalorder %s20, 1
          %s176 = scalar_select %p175, %s20, 1
          %s177 = smul.addr %s176, 8
          %s178 = smul.addr %s177, 4
          %s179 = scalar_lea.vmem %s0, %s178
        $region28: #{tpu_custom_call.1} parent=23 // pred_fallthru
          _
        // Predicated region
        $region29: #{tpu_custom_call.1} parent=23 // pred_check
          %p180 = pneg %p71
        $region30: #{tpu_custom_call.1} parent=23 // pred_check_branch
          %182 = sbr.rel (%p180) target = $region32
        $region31: #{tpu_custom_call.1} parent=23 // pred_region
          %p183 = scmp.lt.s32.totalorder %s20, 1
          %s184 = scalar_select %p183, %s20, 1
          %s185 = smul.addr %s184, 8
          %s186 = smul.addr %s185, 4
          %s187 = scalar_lea.vmem %s1, %s186
        $region32: #{tpu_custom_call.1} parent=23 // pred_fallthru
          _
      $region24: #{tpu_custom_call.1} parent=5 // pred_fallthru
        _
      %p188 = scmp.le.s32.totalorder 1, %s13
      %p189 = scmp.lt.s32.totalorder %s13, 5
      %p190 = pnand %p188, %p189
      %p191 = pneg %p190
      // Predicated region
      $region33: #{tpu_custom_call.1} parent=5 // pred_check
        _
      $region34: #{tpu_custom_call.1} parent=5 // pred_check_branch
        %193 = sbr.rel (%p190) target = $region36
      $region35: #{tpu_custom_call.1} parent=5 // pred_region
        %s194 = ssub.s32 %s13, 1
        %p195 = scmp.lt.s32.totalorder %s22, 1
        %s196 = scalar_select %p195, %s22, 1
        %s197 = smul.addr %s196, 8
        %s198 = smul.addr %s197, 4
        %s199 = scalar_lea.vmem %s0, %s198
        %p200 = pneg %p51
        %p201 = pneg %p48
        %p202 = scmp.lt.s32.totalorder %s22, 1
        %s203 = scalar_select %p202, %s22, 1
        %s204 = smul.addr %s203, 8
        %s205 = smul.addr %s204, 4
        %s206 = scalar_lea.vmem %s1, %s205
        %p207 = pneg %p77
        %p208 = pneg %p74
        %p209 = pneg %p98
        %p210 = pneg %p95
        %p211 = pneg %p119
        %p212 = pneg %p116
        %p213 = pneg %p147
        %p214 = pneg %p144
        %s215 = sand.u32 %s134, 1
        %s216 = scalar_lea.sflag [#allocation6], %s215
        %s217 = sand.u32 %s134, 1
        %s218 = smul.addr %s217, 32
        %s219 = scalar_lea.vmem [#allocation5], %s218
        %p220 = scmp.lt.s32.totalorder %s22, 1
        %s221 = scalar_select %p220, %s22, 1
        %s222 = smul.addr %s221, 8
        %s223 = smul.addr %s222, 4
        %s224 = scalar_lea.vmem %s0, %s223
        %p225 = scmp.lt.s32.totalorder %s22, 1
        %s226 = scalar_select %p225, %s22, 1
        %s227 = smul.addr %s226, 8
        %s228 = smul.addr %s227, 4
        %s229 = scalar_lea.vmem %s1, %s228
        %s230 = smul.u32 4, %s23
        %p232 = scmp.eq.s32.totalorder %s23, 0
        // Predicated region
        $region37: #{tpu_custom_call.1} parent=35 // pred_check
          %p233 = pneg %p232
        $region38: #{tpu_custom_call.1} parent=35 // pred_check_branch
          %235 = sbr.rel (%p233) target = $region40
        $region39: #{tpu_custom_call.1} parent=35 // pred_region
          %v236 = vld [vmem:[%s224] sm:$0xf]
          %v237 = vld [vmem:[%s224 + $0x4] sm:$0xf]
          %v238 = vld [vmem:[%s224 + $0x8] sm:$0xf]
          %v239 = vld [vmem:[%s224 + $0xc] sm:$0xf]
          %v240 = vld [vmem:[%s224 + $0x10] sm:$0xf]
          %v241 = vld [vmem:[%s224 + $0x14] sm:$0xf]
          %v242 = vld [vmem:[%s224 + $0x18] sm:$0xf]
          %v243 = vld [vmem:[%s224 + $0x1c] sm:$0xf]
          %v244 = vld [vmem:[%s2] sm:$0xf]
          %v245 = vld [vmem:[%s2 + $0x4] sm:$0xf]
          %v246 = vld [vmem:[%s2 + $0x8] sm:$0xf]
          %v247 = vld [vmem:[%s2 + $0xc] sm:$0x3]
          %v256 = vunpack.c.l.b16 %v236
          %v257 = vunpack.c.l.b16 %v237
          %v258 = vunpack.c.l.b16 %v238
          %v259 = vunpack.c.l.b16 %v239
          %v260 = vunpack.c.l.b16 %v240
          %v261 = vunpack.c.l.b16 %v241
          %v262 = vunpack.c.l.b16 %v242
          %v263 = vunpack.c.l.b16 %v243
          %v264 = vpack.c.b16 %v257, %v256
          %v265 = vpack.c.b16 %v259, %v258
          %v266 = vpack.c.b16 %v261, %v260
          %v267 = vpack.c.b16 %v263, %v262
          %v272 = vunpack.c.l.b16 %v244
          %v273 = vunpack.c.l.b16 %v245
          %v274 = vunpack.c.l.b16 %v246
          %v275 = vunpack.c.l.b16 %v247
          %v276 = vpack.c.b16 %v273, %v272
          %v277 = vpack.c.b16 %v275, %v274
          %vm279 = vcmask 228352
          %v281 = vsel %vm279, %v264, 0
          %v284 = vsel %vm279, %v265, 0
          %v287 = vsel %vm279, %v266, 0
          %v290 = vsel %vm279, %v267, 0
          %vm292 = vcmask 1045504
          %v294 = vsel %vm292, %v277, 0
          %296 = vmatprep.subr.bf16.mxu0 0
          %297 = vmatpush1.bf16.msra.mxu0 0
          %298 = vmatprep.subr.bf16.mxu0 0
          %299 = vmatpush1.bf16.msra.mxu0 0
          %300 = vmatprep.subr.bf16.mxu0 0
          %301 = vmatpush1.bf16.msra.mxu0 0
          %302 = vmatprep.subr.bf16.mxu0 0
          %303 = vmatpush1.bf16.msra.mxu0 0
          %304 = vmatprep.subr.bf16.mxu0 0
          %305 = vmatpush1.bf16.msra.mxu0 0
          %306 = vmatprep.subr.bf16.mxu0 0
          %307 = vmatpush1.bf16.msra.mxu0 0
          %308 = vmatprep.subr.bf16.mxu0 0
          %309 = vmatpush1.bf16.msra.mxu0 %v294
          %310 = vmatprep.subr.bf16.mxu0 0
          %311 = vmatpush1.bf16.msra.mxu0 %v276
          %312 = vmatprep.subr.bf16.mxu0 0
          %313 = vmatpush2.bf16.msra.mxu0 0
          %314 = vmatprep.subr.bf16.mxu0 0
          %315 = vmatpush2.bf16.msra.mxu0 0
          %316 = vmatprep.subr.bf16.mxu0 0
          %317 = vmatpush2.bf16.msra.mxu0 0
          %318 = vmatprep.subr.bf16.mxu0 0
          %319 = vmatpush2.bf16.msra.mxu0 0
          %320 = vmatprep.subr.bf16.mxu0 0
          %321 = vmatpush2.bf16.msra.mxu0 0
          %322 = vmatprep.subr.bf16.mxu0 0
          %323 = vmatpush2.bf16.msra.mxu0 0
          %324 = vmatprep.subr.bf16.mxu0 0
          %325 = vmatpush2.bf16.msra.mxu0 0
          %326 = vmatprep.subr.bf16.mxu0 0
          %327 = vmatpush2.bf16.msra.mxu0 0
          %328 = vmatprep.mubr.bf16.mxu0 0
          %329 = vmatmul.mubr.bf16.gmra.mxu0 %v281
          %v330 = vpop.f32.mrf.mxu0
          %v331 = vadd.f32 0.0, %v330
          %v332 = vpop.f32.mrf.mxu0
          %v333 = vpop.f32.mrf.mxu0
          %v334 = vadd.f32 0.0, %v333
          %v335 = vpop.f32.mrf.mxu0
          %336 = vmatprep.mubr.bf16.mxu0 0
          %337 = vmatmul.mubr.bf16.gmra.mxu0 %v284
          %v338 = vpop.f32.mrf.mxu0
          %v339 = vadd.f32 0.0, %v338
          %v340 = vpop.f32.mrf.mxu0
          %v341 = vpop.f32.mrf.mxu0
          %v342 = vadd.f32 0.0, %v341
          %v343 = vpop.f32.mrf.mxu0
          %344 = vmatprep.mubr.bf16.mxu0 0
          %345 = vmatmul.mubr.bf16.gmra.mxu0 %v287
          %v346 = vpop.f32.mrf.mxu0
          %v347 = vadd.f32 0.0, %v346
          %v348 = vpop.f32.mrf.mxu0
          %v349 = vpop.f32.mrf.mxu0
          %v350 = vadd.f32 0.0, %v349
          %v351 = vpop.f32.mrf.mxu0
          %352 = vmatprep.mubr.bf16.mxu0 0
          %353 = vmatmul.mubr.bf16.gmra.mxu0 %v290
          %v354 = vpop.f32.mrf.mxu0
          %v355 = vadd.f32 0.0, %v354
          %v356 = vpop.f32.mrf.mxu0
          %v357 = vpop.f32.mrf.mxu0
          %v358 = vadd.f32 0.0, %v357
          %v359 = vpop.f32.mrf.mxu0
          %360 = vdwg.mxu0
          %v361 = vpack.c.bf16 %v334, %v331
          %v362 = vpack.c.bf16 %v342, %v339
          %v363 = vpack.c.bf16 %v350, %v347
          %v364 = vpack.c.bf16 %v358, %v355
          %v369 = vunpack.c.l.b16 %v361
          %v370 = vunpack.c.h.b16 %v361
          %v371 = vunpack.c.l.b16 %v362
          %v372 = vunpack.c.h.b16 %v362
          %v373 = vunpack.c.l.b16 %v363
          %v374 = vunpack.c.h.b16 %v363
          %v375 = vunpack.c.l.b16 %v364
          %v376 = vunpack.c.h.b16 %v364
          %v377 = vpack.c.b16 %v369, %v369
          %v378 = vpack.c.b16 %v370, %v370
          %v379 = vpack.c.b16 %v371, %v371
          %v380 = vpack.c.b16 %v372, %v372
          %v381 = vpack.c.b16 %v373, %v373
          %v382 = vpack.c.b16 %v374, %v374
          %v383 = vpack.c.b16 %v375, %v375
          %v384 = vpack.c.b16 %v376, %v376
          %393 = vst [vmem:[#allocation2] sm:$0xf] %v377
          %394 = vst [vmem:[#allocation2 + $0x4] sm:$0xf] %v378
          %395 = vst [vmem:[#allocation2 + $0x8] sm:$0xf] %v379
          %396 = vst [vmem:[#allocation2 + $0xc] sm:$0xf] %v380
          %397 = vst [vmem:[#allocation2 + $0x10] sm:$0xf] %v381
          %398 = vst [vmem:[#allocation2 + $0x14] sm:$0xf] %v382
          %399 = vst [vmem:[#allocation2 + $0x18] sm:$0xf] %v383
          %400 = vst [vmem:[#allocation2 + $0x1c] sm:$0xf] %v384
          %v401 = vld [vmem:[%s229] sm:$0xf]
          %v402 = vld [vmem:[%s229 + $0x4] sm:$0xf]
          %v403 = vld [vmem:[%s229 + $0x8] sm:$0xf]
          %v404 = vld [vmem:[%s229 + $0xc] sm:$0xf]
          %v405 = vld [vmem:[%s229 + $0x10] sm:$0xf]
          %v406 = vld [vmem:[%s229 + $0x14] sm:$0xf]
          %v407 = vld [vmem:[%s229 + $0x18] sm:$0xf]
          %v408 = vld [vmem:[%s229 + $0x1c] sm:$0xf]
          %v409 = vld [vmem:[%s3] sm:$0xff]
          %v410 = vld [vmem:[%s3 + $0x8] sm:$0xff]
          %v411 = vld [vmem:[%s3 + $0x10] sm:$0xff]
          %v412 = vld [vmem:[%s3 + $0x18] sm:$0xff]
          %v421 = vunpack.c.l.b16 %v401
          %v422 = vunpack.c.l.b16 %v402
          %v423 = vunpack.c.l.b16 %v403
          %v424 = vunpack.c.l.b16 %v404
          %v425 = vunpack.c.l.b16 %v405
          %v426 = vunpack.c.l.b16 %v406
          %v427 = vunpack.c.l.b16 %v407
          %v428 = vunpack.c.l.b16 %v408
          %v429 = vpack.c.b16 %v422, %v421
          %v430 = vpack.c.b16 %v424, %v423
          %v431 = vpack.c.b16 %v426, %v425
          %v432 = vpack.c.b16 %v428, %v427
          %v437 = vunpack.c.l.b16 %v409
          %v438 = vunpack.c.h.b16 %v409
          %v439 = vunpack.c.l.b16 %v410
          %v440 = vunpack.c.h.b16 %v410
          %v441 = vunpack.c.l.b16 %v411
          %v442 = vunpack.c.h.b16 %v411
          %v443 = vunpack.c.l.b16 %v412
          %v444 = vunpack.c.h.b16 %v412
          %v445 = vpack.c.b16 %v439, %v437
          %v446 = vpack.c.b16 %v440, %v438
          %v447 = vpack.c.b16 %v443, %v441
          %v448 = vpack.c.b16 %v444, %v442
          %vm453 = vcmask 261120
          %v455 = vsel %vm453, %v429, 0
          %v458 = vsel %vm453, %v430, 0
          %v461 = vsel %vm453, %v431, 0
          %v464 = vsel %vm453, %v432, 0
          %466 = vmatprep.subr.bf16.mxu0 0
          %467 = vmatpush1.bf16.msra.mxu0 0
          %468 = vmatprep.subr.bf16.mxu0 0
          %469 = vmatpush1.bf16.msra.mxu0 0
          %470 = vmatprep.subr.bf16.mxu0 0
          %471 = vmatpush1.bf16.msra.mxu0 0
          %472 = vmatprep.subr.bf16.mxu0 0
          %473 = vmatpush1.bf16.msra.mxu0 0
          %474 = vmatprep.subr.bf16.mxu0 0
          %475 = vmatpush1.bf16.msra.mxu0 0
          %476 = vmatprep.subr.bf16.mxu0 0
          %477 = vmatpush1.bf16.msra.mxu0 0
          %478 = vmatprep.subr.bf16.mxu0 %v448
          %479 = vmatpush1.bf16.msra.mxu0 %v447
          %480 = vmatprep.subr.bf16.mxu0 %v446
          %481 = vmatpush1.bf16.msra.mxu0 %v445
          %482 = vmatprep.subr.bf16.mxu0 0
          %483 = vmatpush2.bf16.msra.mxu0 0
          %484 = vmatprep.subr.bf16.mxu0 0
          %485 = vmatpush2.bf16.msra.mxu0 0
          %486 = vmatprep.subr.bf16.mxu0 0
          %487 = vmatpush2.bf16.msra.mxu0 0
          %488 = vmatprep.subr.bf16.mxu0 0
          %489 = vmatpush2.bf16.msra.mxu0 0
          %490 = vmatprep.subr.bf16.mxu0 0
          %491 = vmatpush2.bf16.msra.mxu0 0
          %492 = vmatprep.subr.bf16.mxu0 0
          %493 = vmatpush2.bf16.msra.mxu0 0
          %494 = vmatprep.subr.bf16.mxu0 0
          %495 = vmatpush2.bf16.msra.mxu0 0
          %496 = vmatprep.subr.bf16.mxu0 0
          %497 = vmatpush2.bf16.msra.mxu0 0
          %498 = vmatprep.mubr.bf16.mxu0 0
          %499 = vmatmul.mubr.bf16.gmra.mxu0 %v455
          %v500 = vpop.f32.mrf.mxu0
          %v501 = vadd.f32 0.0, %v500
          %v502 = vpop.f32.mrf.mxu0
          %v503 = vadd.f32 0.0, %v502
          %v504 = vpop.f32.mrf.mxu0
          %v505 = vadd.f32 0.0, %v504
          %v506 = vpop.f32.mrf.mxu0
          %v507 = vadd.f32 0.0, %v506
          %508 = vmatprep.mubr.bf16.mxu0 0
          %509 = vmatmul.mubr.bf16.gmra.mxu0 %v458
          %v510 = vpop.f32.mrf.mxu0
          %v511 = vadd.f32 0.0, %v510
          %v512 = vpop.f32.mrf.mxu0
          %v513 = vadd.f32 0.0, %v512
          %v514 = vpop.f32.mrf.mxu0
          %v515 = vadd.f32 0.0, %v514
          %v516 = vpop.f32.mrf.mxu0
          %v517 = vadd.f32 0.0, %v516
          %518 = vmatprep.mubr.bf16.mxu0 0
          %519 = vmatmul.mubr.bf16.gmra.mxu0 %v461
          %v520 = vpop.f32.mrf.mxu0
          %v521 = vadd.f32 0.0, %v520
          %v522 = vpop.f32.mrf.mxu0
          %v523 = vadd.f32 0.0, %v522
          %v524 = vpop.f32.mrf.mxu0
          %v525 = vadd.f32 0.0, %v524
          %v526 = vpop.f32.mrf.mxu0
          %v527 = vadd.f32 0.0, %v526
          %528 = vmatprep.mubr.bf16.mxu0 0
          %529 = vmatmul.mubr.bf16.gmra.mxu0 %v464
          %v530 = vpop.f32.mrf.mxu0
          %v531 = vadd.f32 0.0, %v530
          %v532 = vpop.f32.mrf.mxu0
          %v533 = vadd.f32 0.0, %v532
          %v534 = vpop.f32.mrf.mxu0
          %v535 = vadd.f32 0.0, %v534
          %v536 = vpop.f32.mrf.mxu0
          %v537 = vadd.f32 0.0, %v536
          %538 = vdwg.mxu0
          %v539 = vpack.c.bf16 %v505, %v501
          %v540 = vpack.c.bf16 %v515, %v511
          %v541 = vpack.c.bf16 %v525, %v521
          %v542 = vpack.c.bf16 %v535, %v531
          %v547 = vunpack.c.l.b16 %v539
          %v548 = vunpack.c.h.b16 %v539
          %v549 = vunpack.c.l.b16 %v540
          %v550 = vunpack.c.h.b16 %v540
          %v551 = vunpack.c.l.b16 %v541
          %v552 = vunpack.c.h.b16 %v541
          %v553 = vunpack.c.l.b16 %v542
          %v554 = vunpack.c.h.b16 %v542
          %v555 = vpack.c.b16 %v547, %v547
          %v556 = vpack.c.b16 %v548, %v548
          %v557 = vpack.c.b16 %v549, %v549
          %v558 = vpack.c.b16 %v550, %v550
          %v559 = vpack.c.b16 %v551, %v551
          %v560 = vpack.c.b16 %v552, %v552
          %v561 = vpack.c.b16 %v553, %v553
          %v562 = vpack.c.b16 %v554, %v554
          %571 = vst [vmem:[#allocation3] sm:$0xf] %v555
          %572 = vst [vmem:[#allocation3 + $0x4] sm:$0xf] %v556
          %573 = vst [vmem:[#allocation3 + $0x8] sm:$0xf] %v557
          %574 = vst [vmem:[#allocation3 + $0xc] sm:$0xf] %v558
          %575 = vst [vmem:[#allocation3 + $0x10] sm:$0xf] %v559
          %576 = vst [vmem:[#allocation3 + $0x14] sm:$0xf] %v560
          %577 = vst [vmem:[#allocation3 + $0x18] sm:$0xf] %v561
          %578 = vst [vmem:[#allocation3 + $0x1c] sm:$0xf] %v562
          %v579 = vunpack.c.l.bf16 %v236
          %v580 = vunpack.c.l.bf16 %v237
          %v581 = vunpack.c.l.bf16 %v238
          %v582 = vunpack.c.l.bf16 %v239
          %v583 = vunpack.c.l.bf16 %v240
          %v584 = vunpack.c.l.bf16 %v241
          %v585 = vunpack.c.l.bf16 %v242
          %v586 = vunpack.c.l.bf16 %v243
          %588 = vset.pattern.permute.xlu0 27
          %589 = vperm.xlu0 %588, %v579
          %v590 = vpop.permute.xlu0 %589
          %593 = vset.pattern.permute.xlu0 27
          %594 = vperm.xlu0 %593, %v580
          %v595 = vpop.permute.xlu0 %594
          %598 = vset.pattern.permute.xlu0 27
          %599 = vperm.xlu0 %598, %v581
          %v600 = vpop.permute.xlu0 %599
          %603 = vset.pattern.permute.xlu0 27
          %604 = vperm.xlu0 %603, %v582
          %v605 = vpop.permute.xlu0 %604
          %608 = vset.pattern.permute.xlu0 27
          %609 = vperm.xlu0 %608, %v583
          %v610 = vpop.permute.xlu0 %609
          %613 = vset.pattern.permute.xlu0 27
          %614 = vperm.xlu0 %613, %v584
          %v615 = vpop.permute.xlu0 %614
          %618 = vset.pattern.permute.xlu0 27
          %619 = vperm.xlu0 %618, %v585
          %v620 = vpop.permute.xlu0 %619
          %623 = vset.pattern.permute.xlu0 27
          %624 = vperm.xlu0 %623, %v586
          %v625 = vpop.permute.xlu0 %624
          %v627 = vmul.f32 %v590, %v503
          %v628 = vmul.f32 %v595, %v507
          %v629 = vmul.f32 %v600, %v513
          %v630 = vmul.f32 %v605, %v517
          %v631 = vmul.f32 %v610, %v523
          %v632 = vmul.f32 %v615, %v527
          %v633 = vmul.f32 %v620, %v533
          %v634 = vmul.f32 %v625, %v537
          %v635 = vlaneseq
          %v636 = vand.u32 %v635, 127
          %vm637 = vcmp.eq.s32.totalorder %v636, 32
          %v638 = vsel %vm637, 1.0, %v627
          %v639 = vsel %vm637, 1.0, %v628
          %v640 = vsel %vm637, 1.0, %v629
          %v641 = vsel %vm637, 1.0, %v630
          %v642 = vsel %vm637, 1.0, %v631
          %v643 = vsel %vm637, 1.0, %v632
          %v644 = vsel %vm637, 1.0, %v633
          %v645 = vsel %vm637, 1.0, %v634
          %v646 = vpack.c.bf16 %v639, %v638
          %v647 = vpack.c.bf16 %v641, %v640
          %v648 = vpack.c.bf16 %v643, %v642
          %v649 = vpack.c.bf16 %v645, %v644
          %v654 = vunpack.c.l.b16 %v646
          %v655 = vunpack.c.h.b16 %v646
          %v656 = vunpack.c.l.b16 %v647
          %v657 = vunpack.c.h.b16 %v647
          %v658 = vunpack.c.l.b16 %v648
          %v659 = vunpack.c.h.b16 %v648
          %v660 = vunpack.c.l.b16 %v649
          %v661 = vunpack.c.h.b16 %v649
          %v662 = vpack.c.b16 %v654, %v654
          %v663 = vpack.c.b16 %v655, %v655
          %v664 = vpack.c.b16 %v656, %v656
          %v665 = vpack.c.b16 %v657, %v657
          %v666 = vpack.c.b16 %v658, %v658
          %v667 = vpack.c.b16 %v659, %v659
          %v668 = vpack.c.b16 %v660, %v660
          %v669 = vpack.c.b16 %v661, %v661
          %678 = vst [vmem:[#allocation4] sm:$0xf] %v662
          %679 = vst [vmem:[#allocation4 + $0x4] sm:$0xf] %v663
          %680 = vst [vmem:[#allocation4 + $0x8] sm:$0xf] %v664
          %681 = vst [vmem:[#allocation4 + $0xc] sm:$0xf] %v665
          %682 = vst [vmem:[#allocation4 + $0x10] sm:$0xf] %v666
          %683 = vst [vmem:[#allocation4 + $0x14] sm:$0xf] %v667
          %684 = vst [vmem:[#allocation4 + $0x18] sm:$0xf] %v668
          %685 = vst [vmem:[#allocation4 + $0x1c] sm:$0xf] %v669
        $region40: #{tpu_custom_call.1} parent=35 // pred_fallthru
          _
        %s686 = smul.u32 %s23, 32
        %s687 = sshra.s32 %s686, 3
        %s688 = sand.u32 %s686, 7
        %s689 = smul.addr %s687, 4
        %s690 = scalar_lea.vmem [#allocation3], %s689
        %v691 = vld [vmem:[%s690] sm:$0xf]
        %v692 = vld [vmem:[%s690 + $0x4] sm:$0xf]
        %v693 = vld [vmem:[%s690 + $0x8] sm:$0xf]
        %v694 = vld [vmem:[%s690 + $0xc] sm:$0xf]
        %v695 = vld [vmem:[#allocation2] sm:$0xf]
        %v696 = vld [vmem:[#allocation2 + $0x4] sm:$0xf]
        %v697 = vld [vmem:[#allocation2 + $0x8] sm:$0xf]
        %v698 = vld [vmem:[#allocation2 + $0xc] sm:$0xf]
        %v699 = vld [vmem:[#allocation2 + $0x10] sm:$0xf]
        %v700 = vld [vmem:[#allocation2 + $0x14] sm:$0xf]
        %v701 = vld [vmem:[#allocation2 + $0x18] sm:$0xf]
        %v702 = vld [vmem:[#allocation2 + $0x1c] sm:$0xf]
        %v707 = vunpack.c.l.b16 %v691
        %v708 = vunpack.c.l.b16 %v692
        %v709 = vunpack.c.l.b16 %v693
        %v710 = vunpack.c.l.b16 %v694
        %v711 = vpack.c.b16 %v708, %v707
        %v712 = vpack.c.b16 %v710, %v709
        %v723 = vunpack.c.l.b16 %v695
        %v724 = vunpack.c.l.b16 %v696
        %v725 = vunpack.c.l.b16 %v697
        %v726 = vunpack.c.l.b16 %v698
        %v727 = vunpack.c.l.b16 %v699
        %v728 = vunpack.c.l.b16 %v700
        %v729 = vunpack.c.l.b16 %v701
        %v730 = vunpack.c.l.b16 %v702
        %v731 = vpack.c.b16 %v724, %v723
        %v732 = vpack.c.b16 %v726, %v725
        %v733 = vpack.c.b16 %v728, %v727
        %v734 = vpack.c.b16 %v730, %v729
        %739 = vmatprep.subr.bf16.mxu0 0
        %740 = vmatpush1.bf16.xpose.msra.mxu0 0
        %741 = vmatprep.subr.bf16.mxu0 0
        %742 = vmatpush1.bf16.xpose.msra.mxu0 0
        %743 = vmatprep.subr.bf16.mxu0 0
        %744 = vmatpush1.bf16.xpose.msra.mxu0 0
        %745 = vmatprep.subr.bf16.mxu0 0
        %746 = vmatpush1.bf16.xpose.msra.mxu0 0
        %747 = vmatprep.subr.bf16.mxu0 0
        %748 = vmatpush1.bf16.xpose.msra.mxu0 %v734
        %749 = vmatprep.subr.bf16.mxu0 0
        %750 = vmatpush1.bf16.xpose.msra.mxu0 %v733
        %751 = vmatprep.subr.bf16.mxu0 0
        %752 = vmatpush1.bf16.xpose.msra.mxu0 %v732
        %753 = vmatprep.subr.bf16.mxu0 0
        %754 = vmatpush1.bf16.xpose.msra.mxu0 %v731
        %755 = vmatprep.subr.bf16.mxu0 0
        %756 = vmatpush2.bf16.xpose.msra.mxu0 0
        %757 = vmatprep.subr.bf16.mxu0 0
        %758 = vmatpush2.bf16.xpose.msra.mxu0 0
        %759 = vmatprep.subr.bf16.mxu0 0
        %760 = vmatpush2.bf16.xpose.msra.mxu0 0
        %761 = vmatprep.subr.bf16.mxu0 0
        %762 = vmatpush2.bf16.xpose.msra.mxu0 0
        %763 = vmatprep.subr.bf16.mxu0 0
        %764 = vmatpush2.bf16.xpose.msra.mxu0 0
        %765 = vmatprep.subr.bf16.mxu0 0
        %766 = vmatpush2.bf16.xpose.msra.mxu0 0
        %767 = vmatprep.subr.bf16.mxu0 0
        %768 = vmatpush2.bf16.xpose.msra.mxu0 0
        %769 = vmatprep.subr.bf16.mxu0 0
        %770 = vmatpush2.bf16.xpose.msra.mxu0 0
        %771 = vmatprep.mubr.bf16.mxu0 0
        %772 = vmatmul.mubr.bf16.gmra.mxu0 %v711
        %v773 = vpop.f32.mrf.mxu0
        %v774 = vadd.f32 0.0, %v773
        %v775 = vpop.f32.mrf.mxu0
        %v776 = vpop.f32.mrf.mxu0
        %v777 = vadd.f32 0.0, %v776
        %v778 = vpop.f32.mrf.mxu0
        %779 = vmatprep.mubr.bf16.mxu0 0
        %780 = vmatmul.mubr.bf16.gmra.mxu0 %v712
        %v781 = vpop.f32.mrf.mxu0
        %v782 = vadd.f32 0.0, %v781
        %v783 = vpop.f32.mrf.mxu0
        %v784 = vpop.f32.mrf.mxu0
        %v785 = vadd.f32 0.0, %v784
        %v786 = vpop.f32.mrf.mxu0
        %787 = vdwg.mxu0
        %vm788 = vcmask 523264
        %v789 = vsel %vm788, %v774, -inf
        %790 = vmax.xlane.f32.xlu0 %v789
        %v791 = vpop.xlane.xlu0 %790
        %v792 = vsel %vm788, %v777, -inf
        %793 = vmax.xlane.f32.xlu0 %v792
        %v794 = vpop.xlane.xlu0 %793
        %v795 = vsel %vm788, %v782, -inf
        %796 = vmax.xlane.f32.xlu0 %v795
        %v797 = vpop.xlane.xlu0 %796
        %v798 = vsel %vm788, %v785, -inf
        %799 = vmax.xlane.f32.xlu0 %v798
        %v800 = vpop.xlane.xlu0 %799
        %v801 = vsub.f32 %v774, %v791
        %v802 = vsub.f32 %v777, %v794
        %v803 = vsub.f32 %v782, %v797
        %v804 = vsub.f32 %v785, %v800
        %v805 = vpack.c.bf16 %v802, %v801
        %v806 = vpack.c.bf16 %v804, %v803
        %v808 = vmul.bf16 %v805, 1069105081
        %v809 = vpow.bf16.pop %v808
        %v811 = vmul.bf16 %v806, 1069105081
        %v812 = vpow.bf16.pop %v811
        %v813 = vld [vmem:[#allocation4] sm:$0xf]
        %v814 = vld [vmem:[#allocation4 + $0x4] sm:$0xf]
        %v815 = vld [vmem:[#allocation4 + $0x8] sm:$0xf]
        %v816 = vld [vmem:[#allocation4 + $0xc] sm:$0xf]
        %v817 = vld [vmem:[#allocation4 + $0x10] sm:$0xf]
        %v818 = vld [vmem:[#allocation4 + $0x14] sm:$0xf]
        %v819 = vld [vmem:[#allocation4 + $0x18] sm:$0xf]
        %v820 = vld [vmem:[#allocation4 + $0x1c] sm:$0xf]
        %v829 = vunpack.c.l.b16 %v813
        %v830 = vunpack.c.l.b16 %v814
        %v831 = vunpack.c.l.b16 %v815
        %v832 = vunpack.c.l.b16 %v816
        %v833 = vunpack.c.l.b16 %v817
        %v834 = vunpack.c.l.b16 %v818
        %v835 = vunpack.c.l.b16 %v819
        %v836 = vunpack.c.l.b16 %v820
        %v837 = vpack.c.b16 %v830, %v829
        %v838 = vpack.c.b16 %v832, %v831
        %v839 = vpack.c.b16 %v834, %v833
        %v840 = vpack.c.b16 %v836, %v835
        %v846 = vsel %vm788, %v809, 0
        %v849 = vsel %vm788, %v812, 0
        %851 = vmatprep.subr.bf16.mxu0 0
        %852 = vmatpush1.bf16.msra.mxu0 0
        %853 = vmatprep.subr.bf16.mxu0 0
        %854 = vmatpush1.bf16.msra.mxu0 0
        %855 = vmatprep.subr.bf16.mxu0 0
        %856 = vmatpush1.bf16.msra.mxu0 0
        %857 = vmatprep.subr.bf16.mxu0 0
        %858 = vmatpush1.bf16.msra.mxu0 0
        %859 = vmatprep.subr.bf16.mxu0 0
        %860 = vmatpush1.bf16.msra.mxu0 %v840
        %861 = vmatprep.subr.bf16.mxu0 0
        %862 = vmatpush1.bf16.msra.mxu0 %v839
        %863 = vmatprep.subr.bf16.mxu0 0
        %864 = vmatpush1.bf16.msra.mxu0 %v838
        %865 = vmatprep.subr.bf16.mxu0 0
        %866 = vmatpush1.bf16.msra.mxu0 %v837
        %867 = vmatprep.subr.bf16.mxu0 0
        %868 = vmatpush2.bf16.msra.mxu0 0
        %869 = vmatprep.subr.bf16.mxu0 0
        %870 = vmatpush2.bf16.msra.mxu0 0
        %871 = vmatprep.subr.bf16.mxu0 0
        %872 = vmatpush2.bf16.msra.mxu0 0
        %873 = vmatprep.subr.bf16.mxu0 0
        %874 = vmatpush2.bf16.msra.mxu0 0
        %875 = vmatprep.subr.bf16.mxu0 0
        %876 = vmatpush2.bf16.msra.mxu0 0
        %877 = vmatprep.subr.bf16.mxu0 0
        %878 = vmatpush2.bf16.msra.mxu0 0
        %879 = vmatprep.subr.bf16.mxu0 0
        %880 = vmatpush2.bf16.msra.mxu0 0
        %881 = vmatprep.subr.bf16.mxu0 0
        %882 = vmatpush2.bf16.msra.mxu0 0
        %883 = vmatprep.mubr.bf16.mxu0 0
        %884 = vmatmul.mubr.bf16.gmra.mxu0 %v846
        %v885 = vpop.f32.mrf.mxu0
        %v886 = vadd.f32 0.0, %v885
        %v887 = vpop.f32.mrf.mxu0
        %v888 = vpop.f32.mrf.mxu0
        %v889 = vadd.f32 0.0, %v888
        %v890 = vpop.f32.mrf.mxu0
        %891 = vmatprep.mubr.bf16.mxu0 0
        %892 = vmatmul.mubr.bf16.gmra.mxu0 %v849
        %v893 = vpop.f32.mrf.mxu0
        %v894 = vadd.f32 0.0, %v893
        %v895 = vpop.f32.mrf.mxu0
        %v896 = vpop.f32.mrf.mxu0
        %v897 = vadd.f32 0.0, %v896
        %v898 = vpop.f32.mrf.mxu0
        %899 = vdwg.mxu0
        %v900 = vrcp.pop %v886
        %v901 = vrcp.pop %v889
        %v902 = vrcp.pop %v894
        %v903 = vrcp.pop %v897
        %905 = vset.pattern.permute.xlu0 32
        %906 = vperm.xlu0 %905, %v900
        %v907 = vpop.permute.xlu0 %906
        %910 = vset.pattern.permute.xlu0 32
        %911 = vperm.xlu0 %910, %v901
        %v912 = vpop.permute.xlu0 %911
        %915 = vset.pattern.permute.xlu0 32
        %916 = vperm.xlu0 %915, %v902
        %v917 = vpop.permute.xlu0 %916
        %920 = vset.pattern.permute.xlu0 32
        %921 = vperm.xlu0 %920, %v903
        %v922 = vpop.permute.xlu0 %921
        %v924 = vmul.f32 %v886, %v907
        %v925 = vmul.f32 %v889, %v912
        %v926 = vmul.f32 %v894, %v917
        %v927 = vmul.f32 %v897, %v922
        %928 = vst [vmem:[%s219] sm:$0xff] %v924
        %929 = vst [vmem:[%s219 + $0x8] sm:$0xff] %v925
        %930 = vst [vmem:[%s219 + $0x10] sm:$0xff] %v926
        %931 = vst [vmem:[%s219 + $0x18] sm:$0xff] %v927
        %s932 = sand.u32 %s134, 1
        %s933 = scalar_lea.sflag [#allocation6], %s932
        %s934 = sand.u32 %s134, 1
        %s935 = smul.addr %s934, 32
        %s936 = scalar_lea.vmem [#allocation5], %s935
        // Predicated region
        $region41: #{tpu_custom_call.1} parent=35 // pred_check
          %p937 = pneg %p144
        $region42: #{tpu_custom_call.1} parent=35 // pred_check_branch
          %939 = sbr.rel (%p937) target = $region44
        $region43: #{tpu_custom_call.1} parent=35 // pred_region
          %s940 = smul.u32 4, %s23
          %s942 = ssub.s32 512, 512
          %943 = vsyncadd %s933, %s942
          %s944 = smul.addr %s22, 8
          %s945 = sadd.s32 %s940, %s944
          %s946 = smul.addr %s945, 128
          %s947 = scalar_lea.hbm %s4, %s946
          %s948 = sshll.u32 %s936, 4
          %s949 = int_to_ptr.vmem [resolvable:$true] %s948
          %954 = dma.vmem_to_hbm [thread:$0]  %s949, 512, %s947, %s933, 128, 128, 8
        $region44: #{tpu_custom_call.1} parent=35 // pred_fallthru
          _
      $region36: #{tpu_custom_call.1} parent=5 // pred_fallthru
        _
      %p955 = scmp.le.s32.totalorder 2, %s13
      // Predicated region
      $region45: #{tpu_custom_call.1} parent=5 // pred_check
        %p956 = pneg %p955
      $region46: #{tpu_custom_call.1} parent=5 // pred_check_branch
        %958 = sbr.rel (%p956) target = $region48
      $region47: #{tpu_custom_call.1} parent=5 // pred_region
        %s959 = ssub.s32 %s13, 2
        // Predicated region
        $region49: #{tpu_custom_call.1} parent=47 // pred_check
          %p960 = pneg %p150
        $region50: #{tpu_custom_call.1} parent=47 // pred_check_branch
          %962 = sbr.rel (%p960) target = $region52
        $region51: #{tpu_custom_call.1} parent=47 // pred_region
          %s963 = sand.u32 %s135, 1
          %s964 = scalar_lea.sflag [#allocation6], %s963
          %s965 = sand.u32 %s135, 1
          %s966 = smul.addr %s965, 32
          %s967 = scalar_lea.vmem [#allocation5], %s966
          %968 = dma.done %s964, 512
        $region52: #{tpu_custom_call.1} parent=47 // pred_fallthru
          _
      $region48: #{tpu_custom_call.1} parent=5 // pred_fallthru
        _
    $region6: #{tpu_custom_call.1} parent=1 // loop_footer
      %s17 = sadd.s32 1, %s13
    $region7: #{tpu_custom_call.1} parent=1 // loop_footer_branch
      %12 = sbr.rel target = $region3
    $region8: #{tpu_custom_call.1} parent=1 // loop_exit
      _
    %969 = vsyncpa [#allocation6], 1
    %s970 = scalar_lea.sflag [#allocation6], 1
    %971 = vsyncpa %s970, 1

</llo_original>
